<compile_context>
chip_gen: v6e
topology: v6e:2x2x1
jax: 0.10.0
libtpu: 0.0.40
codegen_flags: <defaults>
</compile_context>

<pallas_src>
import numpy as np
import jax
import jax.numpy as jnp
from jax import lax
from jax.experimental import pallas as pl
from jax.experimental.pallas import tpu as pltpu


# ------------------------------- fused kernel ---------------------------------
def _make_kernel(C0, Cres, Ccond, Cout, H, W):
    C1 = Cout + Cres + Ccond               # conv1 input channels (== C0)
    Ho, Wo = 2 * H, 2 * W
    Wz = Wo + 3                            # shared padded-grid row pitch
    Nz = (Ho + 3) * Wz                     # flattened padded-grid size

    def band_copy(m_ref, band, c, load, off):
        """im2col band `band`: column j holds src[:, j + off] (off may be <0).
        Head/tail columns stay unwritten; they only feed non-interior outputs."""
        if off >= 0:
            m_ref[band * c:(band + 1) * c, 0:Nz - off] = load(off, Nz)
        else:
            m_ref[band * c:(band + 1) * c, -off:Nz] = load(0, Nz + off)

    def kernel(xz_ref, res_ref, cond_ref, mask_ref,
               wd_ref, bd_ref, w1_ref, b1_ref, w2_ref, b2_ref,
               o_ref, h1_s, h2_s, m0_s, m1_s, m2_s):
        interior = mask_ref[...] > 0.0     # (1, Nz) interior-pixel mask
        cond = cond_ref[0]                 # (Ccond, 1) f32

        # ---- stage 1: ConvTranspose2d(4, s=2, p=1) + ReLU ---------------------
        # 4x4 valid conv over the zero-inserted grid; taps shifted by -(Wz+1) so
        # output column j is already the conv1 padded-grid position.
        for a in range(4):
            for b in range(4):
                band_copy(m0_s, a * 4 + b, C0,
                          lambda lo, hi: xz_ref[0, :, lo:hi],
                          (a - 1) * Wz + (b - 1))
        y0 = jnp.dot(wd_ref[...], m0_s[...], preferred_element_type=jnp.float32)
        y0 = jnp.maximum(y0 + bd_ref[...], 0.0)

        # ---- assemble conv1 input [deconv | residual | condition] ------------
        h1_s[0:Cout, :] = jnp.where(interior, y0, 0.0).astype(jnp.bfloat16)
        h1_s[Cout:Cout + Cres, :] = res_ref[0]          # pre-padded by wrapper
        h1_s[Cout + Cres:C1, :] = jnp.where(interior, cond, 0.0
                                            ).astype(jnp.bfloat16)

        # ---- stage 2: Conv2d(3x3, pad 1) + ReLU -------------------------------
        for a in range(3):
            for b in range(3):
                band_copy(m1_s, a * 3 + b, C1,
                          lambda lo, hi: h1_s[:, lo:hi],
                          (a - 1) * Wz + (b - 1))
        y1 = jnp.dot(w1_ref[...], m1_s[...], preferred_element_type=jnp.float32)
        y1 = jnp.maximum(y1 + b1_ref[...], 0.0)
        h2_s[...] = jnp.where(interior, y1, 0.0).astype(jnp.bfloat16)

        # ---- stage 3: Conv2d(3x3, pad 1) + ReLU -------------------------------
        for a in range(3):
            for b in range(3):
                band_copy(m2_s, a * 3 + b, Cout,
                          lambda lo, hi: h2_s[:, lo:hi],
                          (a - 1) * Wz + (b - 1))
        y2 = jnp.dot(w2_ref[...], m2_s[...], preferred_element_type=jnp.float32)
        y2 = jnp.maximum(y2 + b2_ref[...], 0.0)

        # Crop padded grid -> dense (Cout, Ho*Wo) NCHW output (per-row copies).
        for oy in range(Ho):
            o_ref[0, :, oy * Wo:(oy + 1) * Wo] = (
                y2[:, (oy + 1) * Wz + 1:(oy + 1) * Wz + 1 + Wo])

    return kernel


# ------------------------------- public wrapper --------------------------------
@jax.jit
def upsample_forward(packed, x, residual_x, condition):
    """x: (B,Cin,H,W)  residual_x: (B,Cin-Cout,2H,2W)  condition: (B,Ccond)."""
    B, Cin, H, W = x.shape
    _, Cres, Ho, Wo = residual_x.shape
    Ccond = condition.shape[1]
    Cout = packed["w2"].shape[0]
    C0 = Cin + Ccond
    C1 = Cout + Cres + Ccond
    Hz, Wz = Ho + 3, Wo + 3
    Nz = Hz * Wz
    f32, bf16 = jnp.float32, jnp.bfloat16
    zero = jnp.array(0.0, f32)

    # Zero-inserted (stride-2 dilated) + edge-padded deconv input grid:
    # x[i, j] -> padded position (2i+2, 2j+2) in an (Ho+3, Wo+3) grid.
    xz = lax.pad(x.astype(f32), zero,
                 ((0, 0, 0), (0, 0, 0), (2, 2, 1), (2, 2, 1)))
    pat = np.zeros((Hz, Wz), np.float32)
    pat[2:2 * H + 1:2, 2:2 * W + 1:2] = 1.0
    cz = condition[:, :, None, None].astype(f32) * jnp.asarray(pat)
    xz = jnp.concatenate([xz, cz], axis=1).reshape(B, C0, Nz).astype(bf16)

    # Residual, pre-placed on the same padded 2x grid (zero border).
    resp = lax.pad(residual_x.astype(f32), zero,
                   ((0, 0, 0), (0, 0, 0), (1, 2, 0), (1, 2, 0)))
    resp = resp.reshape(B, Cres, Nz).astype(bf16)

    # Interior-pixel mask of the shared padded grid.
    interior = np.zeros((Hz, Wz), np.float32)
    interior[1:Ho + 1, 1:Wo + 1] = 1.0
    mask = jnp.asarray(interior.reshape(1, Nz))

    kernel = _make_kernel(C0, Cres, Ccond, Cout, H, W)
    out = pl.pallas_call(
        kernel,
        out_shape=jax.ShapeDtypeStruct((B, Cout, Ho * Wo), jnp.float32),
        grid=(B,),
        in_specs=[
            pl.BlockSpec((1, C0, Nz), lambda b: (b, 0, 0)),      # xz
            pl.BlockSpec((1, Cres, Nz), lambda b: (b, 0, 0)),    # residual
            pl.BlockSpec((1, Ccond, 1), lambda b: (b, 0, 0)),    # condition
            pl.BlockSpec((1, Nz), lambda b: (0, 0)),             # interior mask
            pl.BlockSpec((Cout, 16 * C0), lambda b: (0, 0)),     # wd
            pl.BlockSpec((Cout, 1), lambda b: (0, 0)),           # bd
            pl.BlockSpec((Cout, 9 * C1), lambda b: (0, 0)),      # w1
            pl.BlockSpec((Cout, 1), lambda b: (0, 0)),           # b1
            pl.BlockSpec((Cout, 9 * Cout), lambda b: (0, 0)),    # w2
            pl.BlockSpec((Cout, 1), lambda b: (0, 0)),           # b2
        ],
        out_specs=pl.BlockSpec((1, Cout, Ho * Wo), lambda b: (b, 0, 0)),
        scratch_shapes=[
            pltpu.VMEM((C1, Nz), jnp.bfloat16),          # conv1 padded input
            pltpu.VMEM((Cout, Nz), jnp.bfloat16),        # conv2 padded input
            pltpu.VMEM((16 * C0, Nz), jnp.bfloat16),     # deconv im2col
            pltpu.VMEM((9 * C1, Nz), jnp.bfloat16),      # conv1 im2col
            pltpu.VMEM((9 * Cout, Nz), jnp.bfloat16),    # conv2 im2col
        ],
        compiler_params=pltpu.CompilerParams(
            dimension_semantics=("parallel",)),
    )(xz, resp, condition[:, :, None].astype(f32), mask,
      packed["wd"], packed["bd"], packed["w1"], packed["b1"],
      packed["w2"], packed["b2"])
    return out.reshape(B, Cout, Ho, Wo)


# ----------------------- params: init + one-time host packing ------------------
def init_torch_params(key, in_channels, out_channels, condition_size):
    """Random params in the exact PyTorch layouts of the module."""
    C0 = in_channels + condition_size
    ks = jax.random.split(key, 6)

    def u(k, shape, fan_in):
        b = fan_in ** -0.5
        return jax.random.uniform(k, shape, jnp.float32, -b, b)

    return dict(
        wt=u(ks[0], (C0, out_channels, 4, 4), C0 * 16),     # ConvTranspose2d
        bd=u(ks[1], (out_channels,), C0 * 16),
        w1=u(ks[2], (out_channels, C0, 3, 3), C0 * 9),      # Conv2d #1
        b1=u(ks[3], (out_channels,), C0 * 9),
        w2=u(ks[4], (out_channels, out_channels, 3, 3), out_channels * 9),
        b2=u(ks[5], (out_channels,), out_channels * 9),
    )


def pack_params(tp):
    """Pack weights into matmul-ready im2col layouts (bf16 MXU operands)."""
    wt = np.asarray(tp["wt"], np.float32)                  # (C0, Cout, 4, 4)
    C0, Cout = wt.shape[0], wt.shape[1]
    # ConvTranspose == 4x4 valid conv on the zero-inserted grid with the
    # flipped, IO-swapped kernel.
    w_eq = np.transpose(wt[:, :, ::-1, ::-1], (1, 0, 2, 3))  # (Cout, C0, 4, 4)
    wd = w_eq.transpose(0, 2, 3, 1).reshape(Cout, 16 * C0)
    w1 = np.asarray(tp["w1"], np.float32).transpose(0, 2, 3, 1).reshape(Cout, -1)
    w2 = np.asarray(tp["w2"], np.float32).transpose(0, 2, 3, 1).reshape(Cout, -1)
    return dict(
        wd=jnp.asarray(wd, jnp.bfloat16),
        w1=jnp.asarray(w1, jnp.bfloat16),
        w2=jnp.asarray(w2, jnp.bfloat16),
        bd=jnp.asarray(np.asarray(tp["bd"], np.float32).reshape(Cout, 1)),
        b1=jnp.asarray(np.asarray(tp["b1"], np.float32).reshape(Cout, 1)),
        b2=jnp.asarray(np.asarray(tp["b2"], np.float32).reshape(Cout, 1)),
    )


# ------------------------------ pure-JAX reference -----------------------------
def _ref_forward(params, x, residual_x, condition, mxu_dtype=jnp.bfloat16):
    """Reference with the kernel's precision policy: conv operands cast to
    `mxu_dtype` (pass jnp.float32 for the exact f32 module), f32 accumulation,
    f32 bias/ReLU."""
    dn = ("NCHW", "OIHW", "NCHW")
    f32 = jnp.float32
    Ccond = condition.shape[1]

    def addc(t):
        b, _, hh, ww = t.shape
        c = jnp.broadcast_to(condition[:, :, None, None].astype(f32),
                             (b, Ccond, hh, ww))
        return jnp.concatenate([t, c], axis=1)

    def conv(lhs, rhs, **kw):
        return lax.conv_general_dilated(
            lhs.astype(mxu_dtype), rhs.astype(mxu_dtype), (1, 1),
            dimension_numbers=dn, preferred_element_type=f32, **kw)

    # ConvTranspose2d(4, s=2, p=1) == dilated conv with flipped, IO-swapped kernel
    w_eq = jnp.transpose(params["wt"][:, :, ::-1, ::-1], (1, 0, 2, 3))
    h = conv(addc(x), w_eq, padding=((2, 2), (2, 2)), lhs_dilation=(2, 2))
    h = jnp.maximum(h + params["bd"][None, :, None, None], 0.0)
    h = jnp.concatenate([h, residual_x], axis=1)
    h = conv(addc(h), params["w1"], padding=((1, 1), (1, 1)))
    h = jnp.maximum(h + params["b1"][None, :, None, None], 0.0)
    h = conv(h, params["w2"], padding=((1, 1), (1, 1)))
    h = jnp.maximum(h + params["b2"][None, :, None, None], 0.0)
    return h


# ----------------------------------- main ---------------------------------------
if __name__ == "__main__":
    in_channels, out_channels, condition_size = 8, 4, 4
    B, H, W = 2, 8, 8

    key = jax.random.PRNGKey(0)
    kp, kx, kr, kc = jax.random.split(key, 4)
    tparams = init_torch_params(kp, in_channels, out_channels, condition_size)
    packed = pack_params(tparams)

    x = jax.random.normal(kx, (B, in_channels, H, W), jnp.float32)
    residual_x = jax.random.normal(
        kr, (B, in_channels - out_channels, 2 * H, 2 * W), jnp.float32)
    condition = jax.random.normal(kc, (B, condition_size), jnp.float32)

    out = upsample_forward(packed, x, residual_x, condition)
    out = jax.block_until_ready(out)
    assert out.shape == (B, out_channels, 2 * H, 2 * W), out.shape

    # Compare against a reference using the same MXU precision policy
    # (bf16 operands, f32 accumulation) -> differences are summation-order only.
    ref = _ref_forward(tparams, x, residual_x, condition)
    err = float(jnp.max(jnp.abs(out - ref)))
    assert err < 2e-2, err
    print("KERNEL_OK")
</pallas_src>

<mosaic_0001>
module attributes {stable_mosaic.version = 11 : i64} {
  func.func @kernel(%arg0: i32, %arg1: memref<1x12x361xbf16, #tpu.memory_space<vmem>>, %arg2: memref<1x4x361xbf16, #tpu.memory_space<vmem>>, %arg3: memref<1x4x1xf32, #tpu.memory_space<vmem>>, %arg4: memref<1x361xf32, #tpu.memory_space<vmem>>, %arg5: memref<4x192xbf16, #tpu.memory_space<vmem>>, %arg6: memref<4x1xf32, #tpu.memory_space<vmem>>, %arg7: memref<4x108xbf16, #tpu.memory_space<vmem>>, %arg8: memref<4x1xf32, #tpu.memory_space<vmem>>, %arg9: memref<4x36xbf16, #tpu.memory_space<vmem>>, %arg10: memref<4x1xf32, #tpu.memory_space<vmem>>, %arg11: memref<1x4x256xf32, #tpu.memory_space<vmem>>, %arg12: memref<12x361xbf16, #tpu.memory_space<vmem>>, %arg13: memref<4x361xbf16, #tpu.memory_space<vmem>>, %arg14: memref<192x361xbf16, #tpu.memory_space<vmem>>, %arg15: memref<108x361xbf16, #tpu.memory_space<vmem>>, %arg16: memref<36x361xbf16, #tpu.memory_space<vmem>>) attributes {dimension_semantics = [#tpu.dimension_semantics<parallel>], iteration_bounds = array<i64: 2>, scalar_prefetch = 0 : i64, scratch_operands = 5 : i64, tpu.core_type = #tpu.core_type<tc>, window_params = [{transform_indices = @transform_0, window_bounds = array<i64: 1, 12, 361>}, {transform_indices = @transform_1, window_bounds = array<i64: 1, 4, 361>}, {transform_indices = @transform_2, window_bounds = array<i64: 1, 4, 1>}, {pipeline_mode = #tpu.pipeline_mode<synchronous>, transform_indices = @transform_3, window_bounds = array<i64: 1, 361>}, {pipeline_mode = #tpu.pipeline_mode<synchronous>, transform_indices = @transform_4, window_bounds = array<i64: 4, 192>}, {pipeline_mode = #tpu.pipeline_mode<synchronous>, transform_indices = @transform_5, window_bounds = array<i64: 4, 1>}, {pipeline_mode = #tpu.pipeline_mode<synchronous>, transform_indices = @transform_6, window_bounds = array<i64: 4, 108>}, {pipeline_mode = #tpu.pipeline_mode<synchronous>, transform_indices = @transform_7, window_bounds = array<i64: 4, 1>}, {pipeline_mode = #tpu.pipeline_mode<synchronous>, transform_indices = @transform_8, window_bounds = array<i64: 4, 36>}, {pipeline_mode = #tpu.pipeline_mode<synchronous>, transform_indices = @transform_9, window_bounds = array<i64: 4, 1>}, {transform_indices = @transform_10, window_bounds = array<i64: 1, 4, 256>}]} {
    %c0 = arith.constant 0 : index
    %c0_0 = arith.constant 0 : index
    %0 = vector.load %arg4[%c0, %c0_0] : memref<1x361xf32, #tpu.memory_space<vmem>>, vector<1x361xf32>
    %cst = arith.constant 0.000000e+00 : f32
    %1 = vector.broadcast %cst : f32 to vector<1x361xf32>
    %2 = arith.cmpf ogt, %0, %1 : vector<1x361xf32>
    %c0_1 = arith.constant 0 : index
    %c0_2 = arith.constant 0 : index
    %c0_3 = arith.constant 0 : index
    %3 = vector.load %arg3[%c0_1, %c0_2, %c0_3] : memref<1x4x1xf32, #tpu.memory_space<vmem>>, vector<1x4x1xf32>
    %4 = vector.shape_cast %3 : vector<1x4x1xf32> to vector<4x1xf32>
    %c0_4 = arith.constant 0 : index
    %c0_5 = arith.constant 0 : index
    %c0_6 = arith.constant 0 : index
    %5 = vector.load %arg1[%c0_4, %c0_5, %c0_6] : memref<1x12x361xbf16, #tpu.memory_space<vmem>>, vector<1x12x341xbf16>
    %6 = vector.shape_cast %5 : vector<1x12x341xbf16> to vector<12x341xbf16>
    %c0_7 = arith.constant 0 : index
    %c20 = arith.constant 20 : index
    %7 = vector.load %arg14[%c0_7, %c20] : memref<192x361xbf16, #tpu.memory_space<vmem>>, vector<12x341xbf16>
    tpu.vector_store %arg14[%c0_7, %c20], %6 {strides = array<i32>} : memref<192x361xbf16, #tpu.memory_space<vmem>>, vector<12x341xbf16>,
    %c0_8 = arith.constant 0 : index
    %c0_9 = arith.constant 0 : index
    %c0_10 = arith.constant 0 : index
    %8 = vector.load %arg1[%c0_8, %c0_9, %c0_10] : memref<1x12x361xbf16, #tpu.memory_space<vmem>>, vector<1x12x342xbf16>
    %9 = vector.shape_cast %8 : vector<1x12x342xbf16> to vector<12x342xbf16>
    %c12 = arith.constant 12 : index
    %c19 = arith.constant 19 : index
    %10 = vector.load %arg14[%c12, %c19] : memref<192x361xbf16, #tpu.memory_space<vmem>>, vector<12x342xbf16>
    tpu.vector_store %arg14[%c12, %c19], %9 {strides = array<i32>} : memref<192x361xbf16, #tpu.memory_space<vmem>>, vector<12x342xbf16>,
    %c0_11 = arith.constant 0 : index
    %c0_12 = arith.constant 0 : index
    %c0_13 = arith.constant 0 : index
    %11 = vector.load %arg1[%c0_11, %c0_12, %c0_13] : memref<1x12x361xbf16, #tpu.memory_space<vmem>>, vector<1x12x343xbf16>
    %12 = vector.shape_cast %11 : vector<1x12x343xbf16> to vector<12x343xbf16>
    %c24 = arith.constant 24 : index
    %c18 = arith.constant 18 : index
    %13 = vector.load %arg14[%c24, %c18] : memref<192x361xbf16, #tpu.memory_space<vmem>>, vector<12x343xbf16>
    tpu.vector_store %arg14[%c24, %c18], %12 {strides = array<i32>} : memref<192x361xbf16, #tpu.memory_space<vmem>>, vector<12x343xbf16>,
    %c0_14 = arith.constant 0 : index
    %c0_15 = arith.constant 0 : index
    %c0_16 = arith.constant 0 : index
    %14 = vector.load %arg1[%c0_14, %c0_15, %c0_16] : memref<1x12x361xbf16, #tpu.memory_space<vmem>>, vector<1x12x344xbf16>
    %15 = vector.shape_cast %14 : vector<1x12x344xbf16> to vector<12x344xbf16>
    %c36 = arith.constant 36 : index
    %c17 = arith.constant 17 : index
    %16 = vector.load %arg14[%c36, %c17] : memref<192x361xbf16, #tpu.memory_space<vmem>>, vector<12x344xbf16>
    tpu.vector_store %arg14[%c36, %c17], %15 {strides = array<i32>} : memref<192x361xbf16, #tpu.memory_space<vmem>>, vector<12x344xbf16>,
    %c0_17 = arith.constant 0 : index
    %c0_18 = arith.constant 0 : index
    %c0_19 = arith.constant 0 : index
    %17 = vector.load %arg1[%c0_17, %c0_18, %c0_19] : memref<1x12x361xbf16, #tpu.memory_space<vmem>>, vector<1x12x360xbf16>
    %18 = vector.shape_cast %17 : vector<1x12x360xbf16> to vector<12x360xbf16>
    %c48 = arith.constant 48 : index
    %c1 = arith.constant 1 : index
    %19 = vector.load %arg14[%c48, %c1] : memref<192x361xbf16, #tpu.memory_space<vmem>>, vector<12x360xbf16>
    tpu.vector_store %arg14[%c48, %c1], %18 {strides = array<i32>} : memref<192x361xbf16, #tpu.memory_space<vmem>>, vector<12x360xbf16>,
    %c0_20 = arith.constant 0 : index
    %c0_21 = arith.constant 0 : index
    %c0_22 = arith.constant 0 : index
    %20 = vector.load %arg1[%c0_20, %c0_21, %c0_22] : memref<1x12x361xbf16, #tpu.memory_space<vmem>>, vector<1x12x361xbf16>
    %21 = vector.shape_cast %20 : vector<1x12x361xbf16> to vector<12x361xbf16>
    %c60 = arith.constant 60 : index
    %c0_23 = arith.constant 0 : index
    %22 = vector.load %arg14[%c60, %c0_23] : memref<192x361xbf16, #tpu.memory_space<vmem>>, vector<12x361xbf16>
    tpu.vector_store %arg14[%c60, %c0_23], %21 {strides = array<i32>} : memref<192x361xbf16, #tpu.memory_space<vmem>>, vector<12x361xbf16>,
    %c0_24 = arith.constant 0 : index
    %c0_25 = arith.constant 0 : index
    %c1_26 = arith.constant 1 : index
    %23 = vector.load %arg1[%c0_24, %c0_25, %c1_26] : memref<1x12x361xbf16, #tpu.memory_space<vmem>>, vector<1x12x360xbf16>
    %24 = vector.shape_cast %23 : vector<1x12x360xbf16> to vector<12x360xbf16>
    %c72 = arith.constant 72 : index
    %c0_27 = arith.constant 0 : index
    %25 = vector.load %arg14[%c72, %c0_27] : memref<192x361xbf16, #tpu.memory_space<vmem>>, vector<12x360xbf16>
    tpu.vector_store %arg14[%c72, %c0_27], %24 {strides = array<i32>} : memref<192x361xbf16, #tpu.memory_space<vmem>>, vector<12x360xbf16>,
    %c0_28 = arith.constant 0 : index
    %c0_29 = arith.constant 0 : index
    %c2 = arith.constant 2 : index
    %26 = vector.load %arg1[%c0_28, %c0_29, %c2] : memref<1x12x361xbf16, #tpu.memory_space<vmem>>, vector<1x12x359xbf16>
    %27 = vector.shape_cast %26 : vector<1x12x359xbf16> to vector<12x359xbf16>
    %c84 = arith.constant 84 : index
    %c0_30 = arith.constant 0 : index
    %28 = vector.load %arg14[%c84, %c0_30] : memref<192x361xbf16, #tpu.memory_space<vmem>>, vector<12x359xbf16>
    tpu.vector_store %arg14[%c84, %c0_30], %27 {strides = array<i32>} : memref<192x361xbf16, #tpu.memory_space<vmem>>, vector<12x359xbf16>,
    %c0_31 = arith.constant 0 : index
    %c0_32 = arith.constant 0 : index
    %c18_33 = arith.constant 18 : index
    %29 = vector.load %arg1[%c0_31, %c0_32, %c18_33] : memref<1x12x361xbf16, #tpu.memory_space<vmem>>, vector<1x12x343xbf16>
    %30 = vector.shape_cast %29 : vector<1x12x343xbf16> to vector<12x343xbf16>
    %c96 = arith.constant 96 : index
    %c0_34 = arith.constant 0 : index
    %31 = vector.load %arg14[%c96, %c0_34] : memref<192x361xbf16, #tpu.memory_space<vmem>>, vector<12x343xbf16>
    tpu.vector_store %arg14[%c96, %c0_34], %30 {strides = array<i32>} : memref<192x361xbf16, #tpu.memory_space<vmem>>, vector<12x343xbf16>,
    %c0_35 = arith.constant 0 : index
    %c0_36 = arith.constant 0 : index
    %c19_37 = arith.constant 19 : index
    %32 = vector.load %arg1[%c0_35, %c0_36, %c19_37] : memref<1x12x361xbf16, #tpu.memory_space<vmem>>, vector<1x12x342xbf16>
    %33 = vector.shape_cast %32 : vector<1x12x342xbf16> to vector<12x342xbf16>
    %c108 = arith.constant 108 : index
    %c0_38 = arith.constant 0 : index
    %34 = vector.load %arg14[%c108, %c0_38] : memref<192x361xbf16, #tpu.memory_space<vmem>>, vector<12x342xbf16>
    tpu.vector_store %arg14[%c108, %c0_38], %33 {strides = array<i32>} : memref<192x361xbf16, #tpu.memory_space<vmem>>, vector<12x342xbf16>,
    %c0_39 = arith.constant 0 : index
    %c0_40 = arith.constant 0 : index
    %c20_41 = arith.constant 20 : index
    %35 = vector.load %arg1[%c0_39, %c0_40, %c20_41] : memref<1x12x361xbf16, #tpu.memory_space<vmem>>, vector<1x12x341xbf16>
    %36 = vector.shape_cast %35 : vector<1x12x341xbf16> to vector<12x341xbf16>
    %c120 = arith.constant 120 : index
    %c0_42 = arith.constant 0 : index
    %37 = vector.load %arg14[%c120, %c0_42] : memref<192x361xbf16, #tpu.memory_space<vmem>>, vector<12x341xbf16>
    tpu.vector_store %arg14[%c120, %c0_42], %36 {strides = array<i32>} : memref<192x361xbf16, #tpu.memory_space<vmem>>, vector<12x341xbf16>,
    %c0_43 = arith.constant 0 : index
    %c0_44 = arith.constant 0 : index
    %c21 = arith.constant 21 : index
    %38 = vector.load %arg1[%c0_43, %c0_44, %c21] : memref<1x12x361xbf16, #tpu.memory_space<vmem>>, vector<1x12x340xbf16>
    %39 = vector.shape_cast %38 : vector<1x12x340xbf16> to vector<12x340xbf16>
    %c132 = arith.constant 132 : index
    %c0_45 = arith.constant 0 : index
    %40 = vector.load %arg14[%c132, %c0_45] : memref<192x361xbf16, #tpu.memory_space<vmem>>, vector<12x340xbf16>
    tpu.vector_store %arg14[%c132, %c0_45], %39 {strides = array<i32>} : memref<192x361xbf16, #tpu.memory_space<vmem>>, vector<12x340xbf16>,
    %c0_46 = arith.constant 0 : index
    %c0_47 = arith.constant 0 : index
    %c37 = arith.constant 37 : index
    %41 = vector.load %arg1[%c0_46, %c0_47, %c37] : memref<1x12x361xbf16, #tpu.memory_space<vmem>>, vector<1x12x324xbf16>
    %42 = vector.shape_cast %41 : vector<1x12x324xbf16> to vector<12x324xbf16>
    %c144 = arith.constant 144 : index
    %c0_48 = arith.constant 0 : index
    %43 = vector.load %arg14[%c144, %c0_48] : memref<192x361xbf16, #tpu.memory_space<vmem>>, vector<12x324xbf16>
    tpu.vector_store %arg14[%c144, %c0_48], %42 {strides = array<i32>} : memref<192x361xbf16, #tpu.memory_space<vmem>>, vector<12x324xbf16>,
    %c0_49 = arith.constant 0 : index
    %c0_50 = arith.constant 0 : index
    %c38 = arith.constant 38 : index
    %44 = vector.load %arg1[%c0_49, %c0_50, %c38] : memref<1x12x361xbf16, #tpu.memory_space<vmem>>, vector<1x12x323xbf16>
    %45 = vector.shape_cast %44 : vector<1x12x323xbf16> to vector<12x323xbf16>
    %c156 = arith.constant 156 : index
    %c0_51 = arith.constant 0 : index
    %46 = vector.load %arg14[%c156, %c0_51] : memref<192x361xbf16, #tpu.memory_space<vmem>>, vector<12x323xbf16>
    tpu.vector_store %arg14[%c156, %c0_51], %45 {strides = array<i32>} : memref<192x361xbf16, #tpu.memory_space<vmem>>, vector<12x323xbf16>,
    %c0_52 = arith.constant 0 : index
    %c0_53 = arith.constant 0 : index
    %c39 = arith.constant 39 : index
    %47 = vector.load %arg1[%c0_52, %c0_53, %c39] : memref<1x12x361xbf16, #tpu.memory_space<vmem>>, vector<1x12x322xbf16>
    %48 = vector.shape_cast %47 : vector<1x12x322xbf16> to vector<12x322xbf16>
    %c168 = arith.constant 168 : index
    %c0_54 = arith.constant 0 : index
    %49 = vector.load %arg14[%c168, %c0_54] : memref<192x361xbf16, #tpu.memory_space<vmem>>, vector<12x322xbf16>
    tpu.vector_store %arg14[%c168, %c0_54], %48 {strides = array<i32>} : memref<192x361xbf16, #tpu.memory_space<vmem>>, vector<12x322xbf16>,
    %c0_55 = arith.constant 0 : index
    %c0_56 = arith.constant 0 : index
    %c40 = arith.constant 40 : index
    %50 = vector.load %arg1[%c0_55, %c0_56, %c40] : memref<1x12x361xbf16, #tpu.memory_space<vmem>>, vector<1x12x321xbf16>
    %51 = vector.shape_cast %50 : vector<1x12x321xbf16> to vector<12x321xbf16>
    %c180 = arith.constant 180 : index
    %c0_57 = arith.constant 0 : index
    %52 = vector.load %arg14[%c180, %c0_57] : memref<192x361xbf16, #tpu.memory_space<vmem>>, vector<12x321xbf16>
    tpu.vector_store %arg14[%c180, %c0_57], %51 {strides = array<i32>} : memref<192x361xbf16, #tpu.memory_space<vmem>>, vector<12x321xbf16>,
    %c0_58 = arith.constant 0 : index
    %c0_59 = arith.constant 0 : index
    %53 = vector.load %arg5[%c0_58, %c0_59] : memref<4x192xbf16, #tpu.memory_space<vmem>>, vector<4x192xbf16>
    %c0_60 = arith.constant 0 : index
    %c0_61 = arith.constant 0 : index
    %54 = vector.load %arg14[%c0_60, %c0_61] : memref<192x361xbf16, #tpu.memory_space<vmem>>, vector<192x361xbf16>
    %cst_62 = arith.constant dense<0.000000e+00> : vector<4x361xf32>
    %55 = tpu.matmul %53, %54, %cst_62 {dimension_numbers = #tpu.dot_dimension_numbers<[1], [0], [0], [1], [0, 0, 1, 1], [], []>} : vector<4x192xbf16>, vector<192x361xbf16>, vector<4x361xf32> -> vector<4x361xf32>
    %c0_63 = arith.constant 0 : index
    %c0_64 = arith.constant 0 : index
    %56 = vector.load %arg6[%c0_63, %c0_64] : memref<4x1xf32, #tpu.memory_space<vmem>>, vector<4x1xf32>
    %57 = vector.broadcast %56 : vector<4x1xf32> to vector<4x361xf32>
    %58 = arith.addf %55, %57 : vector<4x361xf32>
    %cst_65 = arith.constant 0.000000e+00 : f32
    %59 = vector.broadcast %cst_65 : f32 to vector<4x361xf32>
    %60 = arith.maximumf %58, %59 : vector<4x361xf32>
    %cst_66 = arith.constant 0.000000e+00 : f32
    %61 = vector.shape_cast %2 : vector<1x361xi1> to vector<1x361xi1>
    %62 = vector.broadcast %61 : vector<1x361xi1> to vector<4x361xi1>
    %63 = vector.broadcast %cst_66 : f32 to vector<4x361xf32>
    %64 = arith.select %62, %60, %63 : vector<4x361xi1>, vector<4x361xf32>
    %65 = arith.truncf %64 : vector<4x361xf32> to vector<4x361xbf16>
    %c0_67 = arith.constant 0 : index
    %c0_68 = arith.constant 0 : index
    %66 = vector.load %arg12[%c0_67, %c0_68] : memref<12x361xbf16, #tpu.memory_space<vmem>>, vector<4x361xbf16>
    tpu.vector_store %arg12[%c0_67, %c0_68], %65 {strides = array<i32>} : memref<12x361xbf16, #tpu.memory_space<vmem>>, vector<4x361xbf16>,
    %c0_69 = arith.constant 0 : index
    %c0_70 = arith.constant 0 : index
    %c0_71 = arith.constant 0 : index
    %67 = vector.load %arg2[%c0_69, %c0_70, %c0_71] : memref<1x4x361xbf16, #tpu.memory_space<vmem>>, vector<1x4x361xbf16>
    %68 = vector.shape_cast %67 : vector<1x4x361xbf16> to vector<4x361xbf16>
    %c4 = arith.constant 4 : index
    %c0_72 = arith.constant 0 : index
    %69 = vector.load %arg12[%c4, %c0_72] : memref<12x361xbf16, #tpu.memory_space<vmem>>, vector<4x361xbf16>
    tpu.vector_store %arg12[%c4, %c0_72], %68 {strides = array<i32>} : memref<12x361xbf16, #tpu.memory_space<vmem>>, vector<4x361xbf16>,
    %cst_73 = arith.constant 0.000000e+00 : f32
    %70 = vector.shape_cast %2 : vector<1x361xi1> to vector<1x361xi1>
    %71 = vector.broadcast %70 : vector<1x361xi1> to vector<4x361xi1>
    %72 = vector.shape_cast %4 : vector<4x1xf32> to vector<4x1xf32>
    %73 = vector.broadcast %72 : vector<4x1xf32> to vector<4x361xf32>
    %74 = vector.broadcast %cst_73 : f32 to vector<4x361xf32>
    %75 = arith.select %71, %73, %74 : vector<4x361xi1>, vector<4x361xf32>
    %76 = arith.truncf %75 : vector<4x361xf32> to vector<4x361xbf16>
    %c8 = arith.constant 8 : index
    %c0_74 = arith.constant 0 : index
    %77 = vector.load %arg12[%c8, %c0_74] : memref<12x361xbf16, #tpu.memory_space<vmem>>, vector<4x361xbf16>
    tpu.vector_store %arg12[%c8, %c0_74], %76 {strides = array<i32>} : memref<12x361xbf16, #tpu.memory_space<vmem>>, vector<4x361xbf16>,
    %c0_75 = arith.constant 0 : index
    %c0_76 = arith.constant 0 : index
    %78 = vector.load %arg12[%c0_75, %c0_76] : memref<12x361xbf16, #tpu.memory_space<vmem>>, vector<12x341xbf16>
    %c0_77 = arith.constant 0 : index
    %c20_78 = arith.constant 20 : index
    %79 = vector.load %arg15[%c0_77, %c20_78] : memref<108x361xbf16, #tpu.memory_space<vmem>>, vector<12x341xbf16>
    tpu.vector_store %arg15[%c0_77, %c20_78], %78 {strides = array<i32>} : memref<108x361xbf16, #tpu.memory_space<vmem>>, vector<12x341xbf16>,
    %c0_79 = arith.constant 0 : index
    %c0_80 = arith.constant 0 : index
    %80 = vector.load %arg12[%c0_79, %c0_80] : memref<12x361xbf16, #tpu.memory_space<vmem>>, vector<12x342xbf16>
    %c12_81 = arith.constant 12 : index
    %c19_82 = arith.constant 19 : index
    %81 = vector.load %arg15[%c12_81, %c19_82] : memref<108x361xbf16, #tpu.memory_space<vmem>>, vector<12x342xbf16>
    tpu.vector_store %arg15[%c12_81, %c19_82], %80 {strides = array<i32>} : memref<108x361xbf16, #tpu.memory_space<vmem>>, vector<12x342xbf16>,
    %c0_83 = arith.constant 0 : index
    %c0_84 = arith.constant 0 : index
    %82 = vector.load %arg12[%c0_83, %c0_84] : memref<12x361xbf16, #tpu.memory_space<vmem>>, vector<12x343xbf16>
    %c24_85 = arith.constant 24 : index
    %c18_86 = arith.constant 18 : index
    %83 = vector.load %arg15[%c24_85, %c18_86] : memref<108x361xbf16, #tpu.memory_space<vmem>>, vector<12x343xbf16>
    tpu.vector_store %arg15[%c24_85, %c18_86], %82 {strides = array<i32>} : memref<108x361xbf16, #tpu.memory_space<vmem>>, vector<12x343xbf16>,
    %c0_87 = arith.constant 0 : index
    %c0_88 = arith.constant 0 : index
    %84 = vector.load %arg12[%c0_87, %c0_88] : memref<12x361xbf16, #tpu.memory_space<vmem>>, vector<12x360xbf16>
    %c36_89 = arith.constant 36 : index
    %c1_90 = arith.constant 1 : index
    %85 = vector.load %arg15[%c36_89, %c1_90] : memref<108x361xbf16, #tpu.memory_space<vmem>>, vector<12x360xbf16>
    tpu.vector_store %arg15[%c36_89, %c1_90], %84 {strides = array<i32>} : memref<108x361xbf16, #tpu.memory_space<vmem>>, vector<12x360xbf16>,
    %c0_91 = arith.constant 0 : index
    %c0_92 = arith.constant 0 : index
    %86 = vector.load %arg12[%c0_91, %c0_92] : memref<12x361xbf16, #tpu.memory_space<vmem>>, vector<12x361xbf16>
    %c48_93 = arith.constant 48 : index
    %c0_94 = arith.constant 0 : index
    %87 = vector.load %arg15[%c48_93, %c0_94] : memref<108x361xbf16, #tpu.memory_space<vmem>>, vector<12x361xbf16>
    tpu.vector_store %arg15[%c48_93, %c0_94], %86 {strides = array<i32>} : memref<108x361xbf16, #tpu.memory_space<vmem>>, vector<12x361xbf16>,
    %c0_95 = arith.constant 0 : index
    %c1_96 = arith.constant 1 : index
    %88 = vector.load %arg12[%c0_95, %c1_96] : memref<12x361xbf16, #tpu.memory_space<vmem>>, vector<12x360xbf16>
    %c60_97 = arith.constant 60 : index
    %c0_98 = arith.constant 0 : index
    %89 = vector.load %arg15[%c60_97, %c0_98] : memref<108x361xbf16, #tpu.memory_space<vmem>>, vector<12x360xbf16>
    tpu.vector_store %arg15[%c60_97, %c0_98], %88 {strides = array<i32>} : memref<108x361xbf16, #tpu.memory_space<vmem>>, vector<12x360xbf16>,
    %c0_99 = arith.constant 0 : index
    %c18_100 = arith.constant 18 : index
    %90 = vector.load %arg12[%c0_99, %c18_100] : memref<12x361xbf16, #tpu.memory_space<vmem>>, vector<12x343xbf16>
    %c72_101 = arith.constant 72 : index
    %c0_102 = arith.constant 0 : index
    %91 = vector.load %arg15[%c72_101, %c0_102] : memref<108x361xbf16, #tpu.memory_space<vmem>>, vector<12x343xbf16>
    tpu.vector_store %arg15[%c72_101, %c0_102], %90 {strides = array<i32>} : memref<108x361xbf16, #tpu.memory_space<vmem>>, vector<12x343xbf16>,
    %c0_103 = arith.constant 0 : index
    %c19_104 = arith.constant 19 : index
    %92 = vector.load %arg12[%c0_103, %c19_104] : memref<12x361xbf16, #tpu.memory_space<vmem>>, vector<12x342xbf16>
    %c84_105 = arith.constant 84 : index
    %c0_106 = arith.constant 0 : index
    %93 = vector.load %arg15[%c84_105, %c0_106] : memref<108x361xbf16, #tpu.memory_space<vmem>>, vector<12x342xbf16>
    tpu.vector_store %arg15[%c84_105, %c0_106], %92 {strides = array<i32>} : memref<108x361xbf16, #tpu.memory_space<vmem>>, vector<12x342xbf16>,
    %c0_107 = arith.constant 0 : index
    %c20_108 = arith.constant 20 : index
    %94 = vector.load %arg12[%c0_107, %c20_108] : memref<12x361xbf16, #tpu.memory_space<vmem>>, vector<12x341xbf16>
    %c96_109 = arith.constant 96 : index
    %c0_110 = arith.constant 0 : index
    %95 = vector.load %arg15[%c96_109, %c0_110] : memref<108x361xbf16, #tpu.memory_space<vmem>>, vector<12x341xbf16>
    tpu.vector_store %arg15[%c96_109, %c0_110], %94 {strides = array<i32>} : memref<108x361xbf16, #tpu.memory_space<vmem>>, vector<12x341xbf16>,
    %c0_111 = arith.constant 0 : index
    %c0_112 = arith.constant 0 : index
    %96 = vector.load %arg7[%c0_111, %c0_112] : memref<4x108xbf16, #tpu.memory_space<vmem>>, vector<4x108xbf16>
    %c0_113 = arith.constant 0 : index
    %c0_114 = arith.constant 0 : index
    %97 = vector.load %arg15[%c0_113, %c0_114] : memref<108x361xbf16, #tpu.memory_space<vmem>>, vector<108x361xbf16>
    %cst_115 = arith.constant dense<0.000000e+00> : vector<4x361xf32>
    %98 = tpu.matmul %96, %97, %cst_115 {dimension_numbers = #tpu.dot_dimension_numbers<[1], [0], [0], [1], [0, 0, 1, 1], [], []>} : vector<4x108xbf16>, vector<108x361xbf16>, vector<4x361xf32> -> vector<4x361xf32>
    %c0_116 = arith.constant 0 : index
    %c0_117 = arith.constant 0 : index
    %99 = vector.load %arg8[%c0_116, %c0_117] : memref<4x1xf32, #tpu.memory_space<vmem>>, vector<4x1xf32>
    %100 = vector.broadcast %99 : vector<4x1xf32> to vector<4x361xf32>
    %101 = arith.addf %98, %100 : vector<4x361xf32>
    %cst_118 = arith.constant 0.000000e+00 : f32
    %102 = vector.broadcast %cst_118 : f32 to vector<4x361xf32>
    %103 = arith.maximumf %101, %102 : vector<4x361xf32>
    %cst_119 = arith.constant 0.000000e+00 : f32
    %104 = vector.shape_cast %2 : vector<1x361xi1> to vector<1x361xi1>
    %105 = vector.broadcast %104 : vector<1x361xi1> to vector<4x361xi1>
    %106 = vector.broadcast %cst_119 : f32 to vector<4x361xf32>
    %107 = arith.select %105, %103, %106 : vector<4x361xi1>, vector<4x361xf32>
    %108 = arith.truncf %107 : vector<4x361xf32> to vector<4x361xbf16>
    %c0_120 = arith.constant 0 : index
    %c0_121 = arith.constant 0 : index
    %109 = vector.load %arg13[%c0_120, %c0_121] : memref<4x361xbf16, #tpu.memory_space<vmem>>, vector<4x361xbf16>
    tpu.vector_store %arg13[%c0_120, %c0_121], %108 {strides = array<i32>} : memref<4x361xbf16, #tpu.memory_space<vmem>>, vector<4x361xbf16>,
    %c0_122 = arith.constant 0 : index
    %c0_123 = arith.constant 0 : index
    %110 = vector.load %arg13[%c0_122, %c0_123] : memref<4x361xbf16, #tpu.memory_space<vmem>>, vector<4x341xbf16>
    %c0_124 = arith.constant 0 : index
    %c20_125 = arith.constant 20 : index
    %111 = vector.load %arg16[%c0_124, %c20_125] : memref<36x361xbf16, #tpu.memory_space<vmem>>, vector<4x341xbf16>
    tpu.vector_store %arg16[%c0_124, %c20_125], %110 {strides = array<i32>} : memref<36x361xbf16, #tpu.memory_space<vmem>>, vector<4x341xbf16>,
    %c0_126 = arith.constant 0 : index
    %c0_127 = arith.constant 0 : index
    %112 = vector.load %arg13[%c0_126, %c0_127] : memref<4x361xbf16, #tpu.memory_space<vmem>>, vector<4x342xbf16>
    %c4_128 = arith.constant 4 : index
    %c19_129 = arith.constant 19 : index
    %113 = vector.load %arg16[%c4_128, %c19_129] : memref<36x361xbf16, #tpu.memory_space<vmem>>, vector<4x342xbf16>
    tpu.vector_store %arg16[%c4_128, %c19_129], %112 {strides = array<i32>} : memref<36x361xbf16, #tpu.memory_space<vmem>>, vector<4x342xbf16>,
    %c0_130 = arith.constant 0 : index
    %c0_131 = arith.constant 0 : index
    %114 = vector.load %arg13[%c0_130, %c0_131] : memref<4x361xbf16, #tpu.memory_space<vmem>>, vector<4x343xbf16>
    %c8_132 = arith.constant 8 : index
    %c18_133 = arith.constant 18 : index
    %115 = vector.load %arg16[%c8_132, %c18_133] : memref<36x361xbf16, #tpu.memory_space<vmem>>, vector<4x343xbf16>
    tpu.vector_store %arg16[%c8_132, %c18_133], %114 {strides = array<i32>} : memref<36x361xbf16, #tpu.memory_space<vmem>>, vector<4x343xbf16>,
    %c0_134 = arith.constant 0 : index
    %c0_135 = arith.constant 0 : index
    %116 = vector.load %arg13[%c0_134, %c0_135] : memref<4x361xbf16, #tpu.memory_space<vmem>>, vector<4x360xbf16>
    %c12_136 = arith.constant 12 : index
    %c1_137 = arith.constant 1 : index
    %117 = vector.load %arg16[%c12_136, %c1_137] : memref<36x361xbf16, #tpu.memory_space<vmem>>, vector<4x360xbf16>
    tpu.vector_store %arg16[%c12_136, %c1_137], %116 {strides = array<i32>} : memref<36x361xbf16, #tpu.memory_space<vmem>>, vector<4x360xbf16>,
    %c0_138 = arith.constant 0 : index
    %c0_139 = arith.constant 0 : index
    %118 = vector.load %arg13[%c0_138, %c0_139] : memref<4x361xbf16, #tpu.memory_space<vmem>>, vector<4x361xbf16>
    %c16 = arith.constant 16 : index
    %c0_140 = arith.constant 0 : index
    %119 = vector.load %arg16[%c16, %c0_140] : memref<36x361xbf16, #tpu.memory_space<vmem>>, vector<4x361xbf16>
    tpu.vector_store %arg16[%c16, %c0_140], %118 {strides = array<i32>} : memref<36x361xbf16, #tpu.memory_space<vmem>>, vector<4x361xbf16>,
    %c0_141 = arith.constant 0 : index
    %c1_142 = arith.constant 1 : index
    %120 = vector.load %arg13[%c0_141, %c1_142] : memref<4x361xbf16, #tpu.memory_space<vmem>>, vector<4x360xbf16>
    %c20_143 = arith.constant 20 : index
    %c0_144 = arith.constant 0 : index
    %121 = vector.load %arg16[%c20_143, %c0_144] : memref<36x361xbf16, #tpu.memory_space<vmem>>, vector<4x360xbf16>
    tpu.vector_store %arg16[%c20_143, %c0_144], %120 {strides = array<i32>} : memref<36x361xbf16, #tpu.memory_space<vmem>>, vector<4x360xbf16>,
    %c0_145 = arith.constant 0 : index
    %c18_146 = arith.constant 18 : index
    %122 = vector.load %arg13[%c0_145, %c18_146] : memref<4x361xbf16, #tpu.memory_space<vmem>>, vector<4x343xbf16>
    %c24_147 = arith.constant 24 : index
    %c0_148 = arith.constant 0 : index
    %123 = vector.load %arg16[%c24_147, %c0_148] : memref<36x361xbf16, #tpu.memory_space<vmem>>, vector<4x343xbf16>
    tpu.vector_store %arg16[%c24_147, %c0_148], %122 {strides = array<i32>} : memref<36x361xbf16, #tpu.memory_space<vmem>>, vector<4x343xbf16>,
    %c0_149 = arith.constant 0 : index
    %c19_150 = arith.constant 19 : index
    %124 = vector.load %arg13[%c0_149, %c19_150] : memref<4x361xbf16, #tpu.memory_space<vmem>>, vector<4x342xbf16>
    %c28 = arith.constant 28 : index
    %c0_151 = arith.constant 0 : index
    %125 = vector.load %arg16[%c28, %c0_151] : memref<36x361xbf16, #tpu.memory_space<vmem>>, vector<4x342xbf16>
    tpu.vector_store %arg16[%c28, %c0_151], %124 {strides = array<i32>} : memref<36x361xbf16, #tpu.memory_space<vmem>>, vector<4x342xbf16>,
    %c0_152 = arith.constant 0 : index
    %c20_153 = arith.constant 20 : index
    %126 = vector.load %arg13[%c0_152, %c20_153] : memref<4x361xbf16, #tpu.memory_space<vmem>>, vector<4x341xbf16>
    %c32 = arith.constant 32 : index
    %c0_154 = arith.constant 0 : index
    %127 = vector.load %arg16[%c32, %c0_154] : memref<36x361xbf16, #tpu.memory_space<vmem>>, vector<4x341xbf16>
    tpu.vector_store %arg16[%c32, %c0_154], %126 {strides = array<i32>} : memref<36x361xbf16, #tpu.memory_space<vmem>>, vector<4x341xbf16>,
    %c0_155 = arith.constant 0 : index
    %c0_156 = arith.constant 0 : index
    %128 = vector.load %arg9[%c0_155, %c0_156] : memref<4x36xbf16, #tpu.memory_space<vmem>>, vector<4x36xbf16>
    %c0_157 = arith.constant 0 : index
    %c0_158 = arith.constant 0 : index
    %129 = vector.load %arg16[%c0_157, %c0_158] : memref<36x361xbf16, #tpu.memory_space<vmem>>, vector<36x361xbf16>
    %cst_159 = arith.constant dense<0.000000e+00> : vector<4x361xf32>
    %130 = tpu.matmul %128, %129, %cst_159 {dimension_numbers = #tpu.dot_dimension_numbers<[1], [0], [0], [1], [0, 0, 1, 1], [], []>} : vector<4x36xbf16>, vector<36x361xbf16>, vector<4x361xf32> -> vector<4x361xf32>
    %c0_160 = arith.constant 0 : index
    %c0_161 = arith.constant 0 : index
    %131 = vector.load %arg10[%c0_160, %c0_161] : memref<4x1xf32, #tpu.memory_space<vmem>>, vector<4x1xf32>
    %132 = vector.broadcast %131 : vector<4x1xf32> to vector<4x361xf32>
    %133 = arith.addf %130, %132 : vector<4x361xf32>
    %cst_162 = arith.constant 0.000000e+00 : f32
    %134 = vector.broadcast %cst_162 : f32 to vector<4x361xf32>
    %135 = arith.maximumf %133, %134 : vector<4x361xf32>
    %136 = vector.extract_strided_slice %135 {offsets = [0, 20], sizes = [4, 16], strides = [1, 1]} : vector<4x361xf32> to vector<4x16xf32>
    %c0_163 = arith.constant 0 : index
    %c0_164 = arith.constant 0 : index
    %c0_165 = arith.constant 0 : index
    %137 = vector.load %arg11[%c0_163, %c0_164, %c0_165] : memref<1x4x256xf32, #tpu.memory_space<vmem>>, vector<1x4x16xf32>
    %138 = vector.shape_cast %137 : vector<1x4x16xf32> to vector<4x16xf32>
    %139 = vector.shape_cast %136 : vector<4x16xf32> to vector<1x4x16xf32>
    tpu.vector_store %arg11[%c0_163, %c0_164, %c0_165], %139 {strides = array<i32>} : memref<1x4x256xf32, #tpu.memory_space<vmem>>, vector<1x4x16xf32>,
    %140 = vector.extract_strided_slice %135 {offsets = [0, 39], sizes = [4, 16], strides = [1, 1]} : vector<4x361xf32> to vector<4x16xf32>
    %c0_166 = arith.constant 0 : index
    %c0_167 = arith.constant 0 : index
    %c16_168 = arith.constant 16 : index
    %141 = vector.load %arg11[%c0_166, %c0_167, %c16_168] : memref<1x4x256xf32, #tpu.memory_space<vmem>>, vector<1x4x16xf32>
    %142 = vector.shape_cast %141 : vector<1x4x16xf32> to vector<4x16xf32>
    %143 = vector.shape_cast %140 : vector<4x16xf32> to vector<1x4x16xf32>
    tpu.vector_store %arg11[%c0_166, %c0_167, %c16_168], %143 {strides = array<i32>} : memref<1x4x256xf32, #tpu.memory_space<vmem>>, vector<1x4x16xf32>,
    %144 = vector.extract_strided_slice %135 {offsets = [0, 58], sizes = [4, 16], strides = [1, 1]} : vector<4x361xf32> to vector<4x16xf32>
    %c0_169 = arith.constant 0 : index
    %c0_170 = arith.constant 0 : index
    %c32_171 = arith.constant 32 : index
    %145 = vector.load %arg11[%c0_169, %c0_170, %c32_171] : memref<1x4x256xf32, #tpu.memory_space<vmem>>, vector<1x4x16xf32>
    %146 = vector.shape_cast %145 : vector<1x4x16xf32> to vector<4x16xf32>
    %147 = vector.shape_cast %144 : vector<4x16xf32> to vector<1x4x16xf32>
    tpu.vector_store %arg11[%c0_169, %c0_170, %c32_171], %147 {strides = array<i32>} : memref<1x4x256xf32, #tpu.memory_space<vmem>>, vector<1x4x16xf32>,
    %148 = vector.extract_strided_slice %135 {offsets = [0, 77], sizes = [4, 16], strides = [1, 1]} : vector<4x361xf32> to vector<4x16xf32>
    %c0_172 = arith.constant 0 : index
    %c0_173 = arith.constant 0 : index
    %c48_174 = arith.constant 48 : index
    %149 = vector.load %arg11[%c0_172, %c0_173, %c48_174] : memref<1x4x256xf32, #tpu.memory_space<vmem>>, vector<1x4x16xf32>
    %150 = vector.shape_cast %149 : vector<1x4x16xf32> to vector<4x16xf32>
    %151 = vector.shape_cast %148 : vector<4x16xf32> to vector<1x4x16xf32>
    tpu.vector_store %arg11[%c0_172, %c0_173, %c48_174], %151 {strides = array<i32>} : memref<1x4x256xf32, #tpu.memory_space<vmem>>, vector<1x4x16xf32>,
    %152 = vector.extract_strided_slice %135 {offsets = [0, 96], sizes = [4, 16], strides = [1, 1]} : vector<4x361xf32> to vector<4x16xf32>
    %c0_175 = arith.constant 0 : index
    %c0_176 = arith.constant 0 : index
    %c64 = arith.constant 64 : index
    %153 = vector.load %arg11[%c0_175, %c0_176, %c64] : memref<1x4x256xf32, #tpu.memory_space<vmem>>, vector<1x4x16xf32>
    %154 = vector.shape_cast %153 : vector<1x4x16xf32> to vector<4x16xf32>
    %155 = vector.shape_cast %152 : vector<4x16xf32> to vector<1x4x16xf32>
    tpu.vector_store %arg11[%c0_175, %c0_176, %c64], %155 {strides = array<i32>} : memref<1x4x256xf32, #tpu.memory_space<vmem>>, vector<1x4x16xf32>,
    %156 = vector.extract_strided_slice %135 {offsets = [0, 115], sizes = [4, 16], strides = [1, 1]} : vector<4x361xf32> to vector<4x16xf32>
    %c0_177 = arith.constant 0 : index
    %c0_178 = arith.constant 0 : index
    %c80 = arith.constant 80 : index
    %157 = vector.load %arg11[%c0_177, %c0_178, %c80] : memref<1x4x256xf32, #tpu.memory_space<vmem>>, vector<1x4x16xf32>
    %158 = vector.shape_cast %157 : vector<1x4x16xf32> to vector<4x16xf32>
    %159 = vector.shape_cast %156 : vector<4x16xf32> to vector<1x4x16xf32>
    tpu.vector_store %arg11[%c0_177, %c0_178, %c80], %159 {strides = array<i32>} : memref<1x4x256xf32, #tpu.memory_space<vmem>>, vector<1x4x16xf32>,
    %160 = vector.extract_strided_slice %135 {offsets = [0, 134], sizes = [4, 16], strides = [1, 1]} : vector<4x361xf32> to vector<4x16xf32>
    %c0_179 = arith.constant 0 : index
    %c0_180 = arith.constant 0 : index
    %c96_181 = arith.constant 96 : index
    %161 = vector.load %arg11[%c0_179, %c0_180, %c96_181] : memref<1x4x256xf32, #tpu.memory_space<vmem>>, vector<1x4x16xf32>
    %162 = vector.shape_cast %161 : vector<1x4x16xf32> to vector<4x16xf32>
    %163 = vector.shape_cast %160 : vector<4x16xf32> to vector<1x4x16xf32>
    tpu.vector_store %arg11[%c0_179, %c0_180, %c96_181], %163 {strides = array<i32>} : memref<1x4x256xf32, #tpu.memory_space<vmem>>, vector<1x4x16xf32>,
    %164 = vector.extract_strided_slice %135 {offsets = [0, 153], sizes = [4, 16], strides = [1, 1]} : vector<4x361xf32> to vector<4x16xf32>
    %c0_182 = arith.constant 0 : index
    %c0_183 = arith.constant 0 : index
    %c112 = arith.constant 112 : index
    %165 = vector.load %arg11[%c0_182, %c0_183, %c112] : memref<1x4x256xf32, #tpu.memory_space<vmem>>, vector<1x4x16xf32>
    %166 = vector.shape_cast %165 : vector<1x4x16xf32> to vector<4x16xf32>
    %167 = vector.shape_cast %164 : vector<4x16xf32> to vector<1x4x16xf32>
    tpu.vector_store %arg11[%c0_182, %c0_183, %c112], %167 {strides = array<i32>} : memref<1x4x256xf32, #tpu.memory_space<vmem>>, vector<1x4x16xf32>,
    %168 = vector.extract_strided_slice %135 {offsets = [0, 172], sizes = [4, 16], strides = [1, 1]} : vector<4x361xf32> to vector<4x16xf32>
    %c0_184 = arith.constant 0 : index
    %c0_185 = arith.constant 0 : index
    %c128 = arith.constant 128 : index
    %169 = vector.load %arg11[%c0_184, %c0_185, %c128] : memref<1x4x256xf32, #tpu.memory_space<vmem>>, vector<1x4x16xf32>
    %170 = vector.shape_cast %169 : vector<1x4x16xf32> to vector<4x16xf32>
    %171 = vector.shape_cast %168 : vector<4x16xf32> to vector<1x4x16xf32>
    tpu.vector_store %arg11[%c0_184, %c0_185, %c128], %171 {strides = array<i32>} : memref<1x4x256xf32, #tpu.memory_space<vmem>>, vector<1x4x16xf32>,
    %172 = vector.extract_strided_slice %135 {offsets = [0, 191], sizes = [4, 16], strides = [1, 1]} : vector<4x361xf32> to vector<4x16xf32>
    %c0_186 = arith.constant 0 : index
    %c0_187 = arith.constant 0 : index
    %c144_188 = arith.constant 144 : index
    %173 = vector.load %arg11[%c0_186, %c0_187, %c144_188] : memref<1x4x256xf32, #tpu.memory_space<vmem>>, vector<1x4x16xf32>
    %174 = vector.shape_cast %173 : vector<1x4x16xf32> to vector<4x16xf32>
    %175 = vector.shape_cast %172 : vector<4x16xf32> to vector<1x4x16xf32>
    tpu.vector_store %arg11[%c0_186, %c0_187, %c144_188], %175 {strides = array<i32>} : memref<1x4x256xf32, #tpu.memory_space<vmem>>, vector<1x4x16xf32>,
    %176 = vector.extract_strided_slice %135 {offsets = [0, 210], sizes = [4, 16], strides = [1, 1]} : vector<4x361xf32> to vector<4x16xf32>
    %c0_189 = arith.constant 0 : index
    %c0_190 = arith.constant 0 : index
    %c160 = arith.constant 160 : index
    %177 = vector.load %arg11[%c0_189, %c0_190, %c160] : memref<1x4x256xf32, #tpu.memory_space<vmem>>, vector<1x4x16xf32>
    %178 = vector.shape_cast %177 : vector<1x4x16xf32> to vector<4x16xf32>
    %179 = vector.shape_cast %176 : vector<4x16xf32> to vector<1x4x16xf32>
    tpu.vector_store %arg11[%c0_189, %c0_190, %c160], %179 {strides = array<i32>} : memref<1x4x256xf32, #tpu.memory_space<vmem>>, vector<1x4x16xf32>,
    %180 = vector.extract_strided_slice %135 {offsets = [0, 229], sizes = [4, 16], strides = [1, 1]} : vector<4x361xf32> to vector<4x16xf32>
    %c0_191 = arith.constant 0 : index
    %c0_192 = arith.constant 0 : index
    %c176 = arith.constant 176 : index
    %181 = vector.load %arg11[%c0_191, %c0_192, %c176] : memref<1x4x256xf32, #tpu.memory_space<vmem>>, vector<1x4x16xf32>
    %182 = vector.shape_cast %181 : vector<1x4x16xf32> to vector<4x16xf32>
    %183 = vector.shape_cast %180 : vector<4x16xf32> to vector<1x4x16xf32>
    tpu.vector_store %arg11[%c0_191, %c0_192, %c176], %183 {strides = array<i32>} : memref<1x4x256xf32, #tpu.memory_space<vmem>>, vector<1x4x16xf32>,
    %184 = vector.extract_strided_slice %135 {offsets = [0, 248], sizes = [4, 16], strides = [1, 1]} : vector<4x361xf32> to vector<4x16xf32>
    %c0_193 = arith.constant 0 : index
    %c0_194 = arith.constant 0 : index
    %c192 = arith.constant 192 : index
    %185 = vector.load %arg11[%c0_193, %c0_194, %c192] : memref<1x4x256xf32, #tpu.memory_space<vmem>>, vector<1x4x16xf32>
    %186 = vector.shape_cast %185 : vector<1x4x16xf32> to vector<4x16xf32>
    %187 = vector.shape_cast %184 : vector<4x16xf32> to vector<1x4x16xf32>
    tpu.vector_store %arg11[%c0_193, %c0_194, %c192], %187 {strides = array<i32>} : memref<1x4x256xf32, #tpu.memory_space<vmem>>, vector<1x4x16xf32>,
    %188 = vector.extract_strided_slice %135 {offsets = [0, 267], sizes = [4, 16], strides = [1, 1]} : vector<4x361xf32> to vector<4x16xf32>
    %c0_195 = arith.constant 0 : index
    %c0_196 = arith.constant 0 : index
    %c208 = arith.constant 208 : index
    %189 = vector.load %arg11[%c0_195, %c0_196, %c208] : memref<1x4x256xf32, #tpu.memory_space<vmem>>, vector<1x4x16xf32>
    %190 = vector.shape_cast %189 : vector<1x4x16xf32> to vector<4x16xf32>
    %191 = vector.shape_cast %188 : vector<4x16xf32> to vector<1x4x16xf32>
    tpu.vector_store %arg11[%c0_195, %c0_196, %c208], %191 {strides = array<i32>} : memref<1x4x256xf32, #tpu.memory_space<vmem>>, vector<1x4x16xf32>,
    %192 = vector.extract_strided_slice %135 {offsets = [0, 286], sizes = [4, 16], strides = [1, 1]} : vector<4x361xf32> to vector<4x16xf32>
    %c0_197 = arith.constant 0 : index
    %c0_198 = arith.constant 0 : index
    %c224 = arith.constant 224 : index
    %193 = vector.load %arg11[%c0_197, %c0_198, %c224] : memref<1x4x256xf32, #tpu.memory_space<vmem>>, vector<1x4x16xf32>
    %194 = vector.shape_cast %193 : vector<1x4x16xf32> to vector<4x16xf32>
    %195 = vector.shape_cast %192 : vector<4x16xf32> to vector<1x4x16xf32>
    tpu.vector_store %arg11[%c0_197, %c0_198, %c224], %195 {strides = array<i32>} : memref<1x4x256xf32, #tpu.memory_space<vmem>>, vector<1x4x16xf32>,
    %196 = vector.extract_strided_slice %135 {offsets = [0, 305], sizes = [4, 16], strides = [1, 1]} : vector<4x361xf32> to vector<4x16xf32>
    %c0_199 = arith.constant 0 : index
    %c0_200 = arith.constant 0 : index
    %c240 = arith.constant 240 : index
    %197 = vector.load %arg11[%c0_199, %c0_200, %c240] : memref<1x4x256xf32, #tpu.memory_space<vmem>>, vector<1x4x16xf32>
    %198 = vector.shape_cast %197 : vector<1x4x16xf32> to vector<4x16xf32>
    %199 = vector.shape_cast %196 : vector<4x16xf32> to vector<1x4x16xf32>
    tpu.vector_store %arg11[%c0_199, %c0_200, %c240], %199 {strides = array<i32>} : memref<1x4x256xf32, #tpu.memory_space<vmem>>, vector<1x4x16xf32>,
    return
  }
  func.func @transform_0(%arg0: i32) -> (i32, i32, i32) {
    %c0_i32 = arith.constant 0 : i32
    %c0_i32_0 = arith.constant 0 : i32
    %c0_i32_1 = arith.constant 0 : i32
    return %arg0, %c0_i32, %c0_i32_0 : i32, i32, i32
  }
  func.func @transform_1(%arg0: i32) -> (i32, i32, i32) {
    %c0_i32 = arith.constant 0 : i32
    %c0_i32_0 = arith.constant 0 : i32
    %c0_i32_1 = arith.constant 0 : i32
    return %arg0, %c0_i32, %c0_i32_0 : i32, i32, i32
  }
  func.func @transform_2(%arg0: i32) -> (i32, i32, i32) {
    %c0_i32 = arith.constant 0 : i32
    %c0_i32_0 = arith.constant 0 : i32
    %c0_i32_1 = arith.constant 0 : i32
    return %arg0, %c0_i32, %c0_i32_0 : i32, i32, i32
  }
  func.func @transform_3(%arg0: i32) -> (i32, i32) {
    %c0_i32 = arith.constant 0 : i32
    %c0_i32_0 = arith.constant 0 : i32
    %c0_i32_1 = arith.constant 0 : i32
    return %c0_i32, %c0_i32_0 : i32, i32
  }
  func.func @transform_4(%arg0: i32) -> (i32, i32) {
    %c0_i32 = arith.constant 0 : i32
    %c0_i32_0 = arith.constant 0 : i32
    %c0_i32_1 = arith.constant 0 : i32
    return %c0_i32, %c0_i32_0 : i32, i32
  }
  func.func @transform_5(%arg0: i32) -> (i32, i32) {
    %c0_i32 = arith.constant 0 : i32
    %c0_i32_0 = arith.constant 0 : i32
    %c0_i32_1 = arith.constant 0 : i32
    return %c0_i32, %c0_i32_0 : i32, i32
  }
  func.func @transform_6(%arg0: i32) -> (i32, i32) {
    %c0_i32 = arith.constant 0 : i32
    %c0_i32_0 = arith.constant 0 : i32
    %c0_i32_1 = arith.constant 0 : i32
    return %c0_i32, %c0_i32_0 : i32, i32
  }
  func.func @transform_7(%arg0: i32) -> (i32, i32) {
    %c0_i32 = arith.constant 0 : i32
    %c0_i32_0 = arith.constant 0 : i32
    %c0_i32_1 = arith.constant 0 : i32
    return %c0_i32, %c0_i32_0 : i32, i32
  }
  func.func @transform_8(%arg0: i32) -> (i32, i32) {
    %c0_i32 = arith.constant 0 : i32
    %c0_i32_0 = arith.constant 0 : i32
    %c0_i32_1 = arith.constant 0 : i32
    return %c0_i32, %c0_i32_0 : i32, i32
  }
  func.func @transform_9(%arg0: i32) -> (i32, i32) {
    %c0_i32 = arith.constant 0 : i32
    %c0_i32_0 = arith.constant 0 : i32
    %c0_i32_1 = arith.constant 0 : i32
    return %c0_i32, %c0_i32_0 : i32, i32
  }
  func.func @transform_10(%arg0: i32) -> (i32, i32, i32) {
    %c0_i32 = arith.constant 0 : i32
    %c0_i32_0 = arith.constant 0 : i32
    %c0_i32_1 = arith.constant 0 : i32
    return %arg0, %c0_i32, %c0_i32_0 : i32, i32, i32
  }
}

</mosaic_0001>

<llo_original>
// kernel: upsample_forward.1
$region0: #{upsample_forward.1}
  #allocation0 [shape = 'u32[]', space=smem, size = 0x4, offset = 0x4, fixed_abs, tag = 'smem constant byte address 0x4 - core index']
  #allocation1 [shape = 'u32[144,128]{1,0:T(1,128)}', space=vmem, size = 0x12000, scoped, tag = 'internal scratch']
  #allocation2 [shape = 'bf16[12,361]{1,0:T(8,128)(2,1)}', space=vmem, size = 0x3000, scoped, tag = 'scratch operand']
  #allocation3 [shape = 'bf16[4,361]{1,0:T(4,128)(2,1)}', space=vmem, size = 0xc00, scoped, tag = 'scratch operand']
  #allocation4 [shape = 'bf16[192,361]{1,0:T(8,128)(2,1)}', space=vmem, size = 0x24000, scoped, tag = 'scratch operand']
  #allocation5 [shape = 'bf16[108,361]{1,0:T(8,128)(2,1)}', space=vmem, size = 0x15000, scoped, tag = 'scratch operand']
  #allocation6 [shape = 'bf16[36,361]{1,0:T(8,128)(2,1)}', space=vmem, size = 0x7800, scoped, tag = 'scratch operand']
  %s0 = inlined_call_operand.vmem [shape: bf16[2,12,361], index: 0, kind: input, shape index: {}]
  %s1 = inlined_call_operand.vmem [shape: bf16[2,4,361], index: 1, kind: input, shape index: {}]
  %s2 = inlined_call_operand.vmem [shape: f32[2,4,1], index: 2, kind: input, shape index: {}]
  %s3 = inlined_call_operand.vmem [shape: f32[1,361], index: 3, kind: input, shape index: {}]
  %s4 = inlined_call_operand.vmem [shape: bf16[4,192], index: 4, kind: input, shape index: {}]
  %s5 = inlined_call_operand.vmem [shape: f32[4,1], index: 5, kind: input, shape index: {}]
  %s6 = inlined_call_operand.vmem [shape: bf16[4,108], index: 6, kind: input, shape index: {}]
  %s7 = inlined_call_operand.vmem [shape: f32[4,1], index: 7, kind: input, shape index: {}]
  %s8 = inlined_call_operand.vmem [shape: bf16[4,36], index: 8, kind: input, shape index: {}]
  %s9 = inlined_call_operand.vmem [shape: f32[4,1], index: 9, kind: input, shape index: {}]
  %s10 = inlined_call_operand.vmem [shape: f32[2,4,256], index: 10, kind: output, shape index: {}]
  %s11 = sld [smem:[#allocation0]]
  $region73: #{upsample_forward.1} parent=0
    _
  %s13 = ssub.s32 1, %s11
  %s14 = scalar_select 0, %s13, %s11
  loop: start=0, step=1, limit=4
  $region2: #{upsample_forward.1} parent=0 // loop_pre_header
    _
  $region3: #{upsample_forward.1} parent=0 // loop_header
    %s16 = sphi 0, %s20
    %p17 = scmp.ge.s32.totalorder %s16, 4
    %s26 = sphi 0, %s28
    %s29 = sphi 0, %s26
    %s30 = sphi 0, %s29
    %s46 = sphi 0, %s30
    %s52 = sphi 0, %s54
    %s55 = sphi 0, %s52
    %s56 = sphi 0, %s55
    %s72 = sphi 0, %s56
    %s78 = sphi 0, %s80
    %s81 = sphi 0, %s78
    %s82 = sphi 0, %s81
    %s98 = sphi 0, %s82
    %s102 = sphi 0, %s102
    %s104 = sphi 0, %s102
    %s105 = sphi 0, %s104
    %s119 = sphi 0, %s105
    %s123 = sphi 0, %s123
    %s125 = sphi 0, %s123
    %s126 = sphi 0, %s125
    %s140 = sphi 0, %s126
    %s144 = sphi 0, %s144
    %s146 = sphi 0, %s144
    %s147 = sphi 0, %s146
    %s161 = sphi 0, %s147
    %s165 = sphi 0, %s165
    %s167 = sphi 0, %s165
    %s168 = sphi 0, %s167
    %s182 = sphi 0, %s168
    %s186 = sphi 0, %s186
    %s188 = sphi 0, %s186
    %s189 = sphi 0, %s188
    %s203 = sphi 0, %s189
    %s207 = sphi 0, %s207
    %s209 = sphi 0, %s207
    %s210 = sphi 0, %s209
    %s224 = sphi 0, %s210
    %s228 = sphi 0, %s228
    %s230 = sphi 0, %s228
    %s231 = sphi 0, %s230
    %s245 = sphi 0, %s231
    %s251 = sphi 0, %s253
    %s254 = sphi 0, %s251
    %s255 = sphi 0, %s254
    %s271 = sphi 0, %s255
  $region4: #{upsample_forward.1} parent=0 // loop_header_branch
    %19 = sbr.rel (%p17) target = $region8
  $region5: #{upsample_forward.1} parent=0 // loop_body
    %s21 = ssub.s32 %s16, 1
    %s22 = ssub.s32 %s16, 2
    %s23 = sadd.s32 %s16, 1
    %s24 = ssub.s32 %s16, %s23
    %p25 = scmp.eq.s32.totalorder %s24, 0
    %s27 = sadd.s32 %s26, 1
    %s28 = scalar_select %p25, %s26, %s27
    %p31 = pneg %p25
    %p32 = scmp.eq.s32.totalorder %s16, 1
    %p33 = por %p31, %p32
    %p34 = scmp.ne.s32.totalorder %s26, %s29
    %p35 = scmp.eq.s32.totalorder %s16, 0
    %p36 = por %p34, %p35
    %p37 = scmp.ne.s32.totalorder %s26, %s29
    %p38 = scmp.eq.s32.totalorder %s21, 1
    %p39 = por %p37, %p38
    %p40 = scmp.ne.s32.totalorder %s29, %s30
    %p41 = scmp.eq.s32.totalorder %s21, 0
    %p42 = por %p40, %p41
    %p43 = scmp.ne.s32.totalorder %s29, %s30
    %p44 = scmp.eq.s32.totalorder %s22, 1
    %p45 = por %p43, %p44
    %p47 = scmp.ne.s32.totalorder %s30, %s46
    %p48 = scmp.eq.s32.totalorder %s22, 0
    %p49 = por %p47, %p48
    %s50 = ssub.s32 %s16, %s23
    %p51 = scmp.eq.s32.totalorder %s50, 0
    %s53 = sadd.s32 %s52, 1
    %s54 = scalar_select %p51, %s52, %s53
    %p57 = pneg %p51
    %p58 = scmp.eq.s32.totalorder %s16, 1
    %p59 = por %p57, %p58
    %p60 = scmp.ne.s32.totalorder %s52, %s55
    %p61 = scmp.eq.s32.totalorder %s16, 0
    %p62 = por %p60, %p61
    %p63 = scmp.ne.s32.totalorder %s52, %s55
    %p64 = scmp.eq.s32.totalorder %s21, 1
    %p65 = por %p63, %p64
    %p66 = scmp.ne.s32.totalorder %s55, %s56
    %p67 = scmp.eq.s32.totalorder %s21, 0
    %p68 = por %p66, %p67
    %p69 = scmp.ne.s32.totalorder %s55, %s56
    %p70 = scmp.eq.s32.totalorder %s22, 1
    %p71 = por %p69, %p70
    %p73 = scmp.ne.s32.totalorder %s56, %s72
    %p74 = scmp.eq.s32.totalorder %s22, 0
    %p75 = por %p73, %p74
    %s76 = ssub.s32 %s16, %s23
    %p77 = scmp.eq.s32.totalorder %s76, 0
    %s79 = sadd.s32 %s78, 1
    %s80 = scalar_select %p77, %s78, %s79
    %p83 = pneg %p77
    %p84 = scmp.eq.s32.totalorder %s16, 1
    %p85 = por %p83, %p84
    %p86 = scmp.ne.s32.totalorder %s78, %s81
    %p87 = scmp.eq.s32.totalorder %s16, 0
    %p88 = por %p86, %p87
    %p89 = scmp.ne.s32.totalorder %s78, %s81
    %p90 = scmp.eq.s32.totalorder %s21, 1
    %p91 = por %p89, %p90
    %p92 = scmp.ne.s32.totalorder %s81, %s82
    %p93 = scmp.eq.s32.totalorder %s21, 0
    %p94 = por %p92, %p93
    %p95 = scmp.ne.s32.totalorder %s81, %s82
    %p96 = scmp.eq.s32.totalorder %s22, 1
    %p97 = por %p95, %p96
    %p99 = scmp.ne.s32.totalorder %s82, %s98
    %p100 = scmp.eq.s32.totalorder %s22, 0
    %p101 = por %p99, %p100
    %s103 = sadd.s32 %s102, 1
    %p106 = scmp.eq.s32.totalorder %s16, 1
    %p107 = scmp.ne.s32.totalorder %s102, %s104
    %p108 = scmp.eq.s32.totalorder %s16, 0
    %p109 = por %p107, %p108
    %p110 = scmp.ne.s32.totalorder %s102, %s104
    %p111 = scmp.eq.s32.totalorder %s21, 1
    %p112 = por %p110, %p111
    %p113 = scmp.ne.s32.totalorder %s104, %s105
    %p114 = scmp.eq.s32.totalorder %s21, 0
    %p115 = por %p113, %p114
    %p116 = scmp.ne.s32.totalorder %s104, %s105
    %p117 = scmp.eq.s32.totalorder %s22, 1
    %p118 = por %p116, %p117
    %p120 = scmp.ne.s32.totalorder %s105, %s119
    %p121 = scmp.eq.s32.totalorder %s22, 0
    %p122 = por %p120, %p121
    %s124 = sadd.s32 %s123, 1
    %p127 = scmp.eq.s32.totalorder %s16, 1
    %p128 = scmp.ne.s32.totalorder %s123, %s125
    %p129 = scmp.eq.s32.totalorder %s16, 0
    %p130 = por %p128, %p129
    %p131 = scmp.ne.s32.totalorder %s123, %s125
    %p132 = scmp.eq.s32.totalorder %s21, 1
    %p133 = por %p131, %p132
    %p134 = scmp.ne.s32.totalorder %s125, %s126
    %p135 = scmp.eq.s32.totalorder %s21, 0
    %p136 = por %p134, %p135
    %p137 = scmp.ne.s32.totalorder %s125, %s126
    %p138 = scmp.eq.s32.totalorder %s22, 1
    %p139 = por %p137, %p138
    %p141 = scmp.ne.s32.totalorder %s126, %s140
    %p142 = scmp.eq.s32.totalorder %s22, 0
    %p143 = por %p141, %p142
    %s145 = sadd.s32 %s144, 1
    %p148 = scmp.eq.s32.totalorder %s16, 1
    %p149 = scmp.ne.s32.totalorder %s144, %s146
    %p150 = scmp.eq.s32.totalorder %s16, 0
    %p151 = por %p149, %p150
    %p152 = scmp.ne.s32.totalorder %s144, %s146
    %p153 = scmp.eq.s32.totalorder %s21, 1
    %p154 = por %p152, %p153
    %p155 = scmp.ne.s32.totalorder %s146, %s147
    %p156 = scmp.eq.s32.totalorder %s21, 0
    %p157 = por %p155, %p156
    %p158 = scmp.ne.s32.totalorder %s146, %s147
    %p159 = scmp.eq.s32.totalorder %s22, 1
    %p160 = por %p158, %p159
    %p162 = scmp.ne.s32.totalorder %s147, %s161
    %p163 = scmp.eq.s32.totalorder %s22, 0
    %p164 = por %p162, %p163
    %s166 = sadd.s32 %s165, 1
    %p169 = scmp.eq.s32.totalorder %s16, 1
    %p170 = scmp.ne.s32.totalorder %s165, %s167
    %p171 = scmp.eq.s32.totalorder %s16, 0
    %p172 = por %p170, %p171
    %p173 = scmp.ne.s32.totalorder %s165, %s167
    %p174 = scmp.eq.s32.totalorder %s21, 1
    %p175 = por %p173, %p174
    %p176 = scmp.ne.s32.totalorder %s167, %s168
    %p177 = scmp.eq.s32.totalorder %s21, 0
    %p178 = por %p176, %p177
    %p179 = scmp.ne.s32.totalorder %s167, %s168
    %p180 = scmp.eq.s32.totalorder %s22, 1
    %p181 = por %p179, %p180
    %p183 = scmp.ne.s32.totalorder %s168, %s182
    %p184 = scmp.eq.s32.totalorder %s22, 0
    %p185 = por %p183, %p184
    %s187 = sadd.s32 %s186, 1
    %p190 = scmp.eq.s32.totalorder %s16, 1
    %p191 = scmp.ne.s32.totalorder %s186, %s188
    %p192 = scmp.eq.s32.totalorder %s16, 0
    %p193 = por %p191, %p192
    %p194 = scmp.ne.s32.totalorder %s186, %s188
    %p195 = scmp.eq.s32.totalorder %s21, 1
    %p196 = por %p194, %p195
    %p197 = scmp.ne.s32.totalorder %s188, %s189
    %p198 = scmp.eq.s32.totalorder %s21, 0
    %p199 = por %p197, %p198
    %p200 = scmp.ne.s32.totalorder %s188, %s189
    %p201 = scmp.eq.s32.totalorder %s22, 1
    %p202 = por %p200, %p201
    %p204 = scmp.ne.s32.totalorder %s189, %s203
    %p205 = scmp.eq.s32.totalorder %s22, 0
    %p206 = por %p204, %p205
    %s208 = sadd.s32 %s207, 1
    %p211 = scmp.eq.s32.totalorder %s16, 1
    %p212 = scmp.ne.s32.totalorder %s207, %s209
    %p213 = scmp.eq.s32.totalorder %s16, 0
    %p214 = por %p212, %p213
    %p215 = scmp.ne.s32.totalorder %s207, %s209
    %p216 = scmp.eq.s32.totalorder %s21, 1
    %p217 = por %p215, %p216
    %p218 = scmp.ne.s32.totalorder %s209, %s210
    %p219 = scmp.eq.s32.totalorder %s21, 0
    %p220 = por %p218, %p219
    %p221 = scmp.ne.s32.totalorder %s209, %s210
    %p222 = scmp.eq.s32.totalorder %s22, 1
    %p223 = por %p221, %p222
    %p225 = scmp.ne.s32.totalorder %s210, %s224
    %p226 = scmp.eq.s32.totalorder %s22, 0
    %p227 = por %p225, %p226
    %s229 = sadd.s32 %s228, 1
    %p232 = scmp.eq.s32.totalorder %s16, 1
    %p233 = scmp.ne.s32.totalorder %s228, %s230
    %p234 = scmp.eq.s32.totalorder %s16, 0
    %p235 = por %p233, %p234
    %p236 = scmp.ne.s32.totalorder %s228, %s230
    %p237 = scmp.eq.s32.totalorder %s21, 1
    %p238 = por %p236, %p237
    %p239 = scmp.ne.s32.totalorder %s230, %s231
    %p240 = scmp.eq.s32.totalorder %s21, 0
    %p241 = por %p239, %p240
    %p242 = scmp.ne.s32.totalorder %s230, %s231
    %p243 = scmp.eq.s32.totalorder %s22, 1
    %p244 = por %p242, %p243
    %p246 = scmp.ne.s32.totalorder %s231, %s245
    %p247 = scmp.eq.s32.totalorder %s22, 0
    %p248 = por %p246, %p247
    %s249 = ssub.s32 %s16, %s23
    %p250 = scmp.eq.s32.totalorder %s249, 0
    %s252 = sadd.s32 %s251, 1
    %s253 = scalar_select %p250, %s251, %s252
    %p256 = pneg %p250
    %p257 = scmp.eq.s32.totalorder %s16, 1
    %p258 = por %p256, %p257
    %p259 = scmp.ne.s32.totalorder %s251, %s254
    %p260 = scmp.eq.s32.totalorder %s16, 0
    %p261 = por %p259, %p260
    %p262 = scmp.ne.s32.totalorder %s251, %s254
    %p263 = scmp.eq.s32.totalorder %s21, 1
    %p264 = por %p262, %p263
    %p265 = scmp.ne.s32.totalorder %s254, %s255
    %p266 = scmp.eq.s32.totalorder %s21, 0
    %p267 = por %p265, %p266
    %p268 = scmp.ne.s32.totalorder %s254, %s255
    %p269 = scmp.eq.s32.totalorder %s22, 1
    %p270 = por %p268, %p269
    %p272 = scmp.ne.s32.totalorder %s255, %s271
    %p273 = scmp.eq.s32.totalorder %s22, 0
    %p274 = por %p272, %p273
    %p275 = scmp.le.s32.totalorder 1, %s16
    %p276 = scmp.lt.s32.totalorder %s16, 3
    %p277 = pnand %p275, %p276
    %p278 = pneg %p277
    // Predicated region
    $region9: #{upsample_forward.1} parent=5 // pred_check
      _
    $region10: #{upsample_forward.1} parent=5 // pred_check_branch
      %280 = sbr.rel (%p277) target = $region12
    $region11: #{upsample_forward.1} parent=5 // pred_region
      %s281 = ssub.s32 %s16, 1
      // Predicated region
      $region13: #{upsample_forward.1} parent=11 // pred_check
        %p282 = pneg %p115
      $region14: #{upsample_forward.1} parent=11 // pred_check_branch
        %284 = sbr.rel (%p282) target = $region16
      $region15: #{upsample_forward.1} parent=11 // pred_region
        _
      $region16: #{upsample_forward.1} parent=11 // pred_fallthru
        _
      // Predicated region
      $region17: #{upsample_forward.1} parent=11 // pred_check
        %p285 = pneg %p136
      $region18: #{upsample_forward.1} parent=11 // pred_check_branch
        %287 = sbr.rel (%p285) target = $region20
      $region19: #{upsample_forward.1} parent=11 // pred_region
        _
      $region20: #{upsample_forward.1} parent=11 // pred_fallthru
        _
      // Predicated region
      $region21: #{upsample_forward.1} parent=11 // pred_check
        %p288 = pneg %p157
      $region22: #{upsample_forward.1} parent=11 // pred_check_branch
        %290 = sbr.rel (%p288) target = $region24
      $region23: #{upsample_forward.1} parent=11 // pred_region
        _
      $region24: #{upsample_forward.1} parent=11 // pred_fallthru
        _
      // Predicated region
      $region25: #{upsample_forward.1} parent=11 // pred_check
        %p291 = pneg %p178
      $region26: #{upsample_forward.1} parent=11 // pred_check_branch
        %293 = sbr.rel (%p291) target = $region28
      $region27: #{upsample_forward.1} parent=11 // pred_region
        _
      $region28: #{upsample_forward.1} parent=11 // pred_fallthru
        _
      // Predicated region
      $region29: #{upsample_forward.1} parent=11 // pred_check
        %p294 = pneg %p199
      $region30: #{upsample_forward.1} parent=11 // pred_check_branch
        %296 = sbr.rel (%p294) target = $region32
      $region31: #{upsample_forward.1} parent=11 // pred_region
        _
      $region32: #{upsample_forward.1} parent=11 // pred_fallthru
        _
      // Predicated region
      $region33: #{upsample_forward.1} parent=11 // pred_check
        %p297 = pneg %p220
      $region34: #{upsample_forward.1} parent=11 // pred_check_branch
        %299 = sbr.rel (%p297) target = $region36
      $region35: #{upsample_forward.1} parent=11 // pred_region
        _
      $region36: #{upsample_forward.1} parent=11 // pred_fallthru
        _
      // Predicated region
      $region37: #{upsample_forward.1} parent=11 // pred_check
        %p300 = pneg %p241
      $region38: #{upsample_forward.1} parent=11 // pred_check_branch
        %302 = sbr.rel (%p300) target = $region40
      $region39: #{upsample_forward.1} parent=11 // pred_region
        _
      $region40: #{upsample_forward.1} parent=11 // pred_fallthru
        _
    $region12: #{upsample_forward.1} parent=5 // pred_fallthru
      _
    %p303 = scmp.lt.s32.totalorder %s16, 2
    // Predicated region
    $region41: #{upsample_forward.1} parent=5 // pred_check
      %p304 = pneg %p303
    $region42: #{upsample_forward.1} parent=5 // pred_check_branch
      %306 = sbr.rel (%p304) target = $region44
    $region43: #{upsample_forward.1} parent=5 // pred_region
      // Predicated region
      $region45: #{upsample_forward.1} parent=43 // pred_check
        %p307 = pneg %p36
      $region46: #{upsample_forward.1} parent=43 // pred_check_branch
        %309 = sbr.rel (%p307) target = $region48
      $region47: #{upsample_forward.1} parent=43 // pred_region
        %p310 = scmp.lt.s32.totalorder %s16, 1
        %s311 = scalar_select %p310, %s16, 1
        %s312 = smul.addr %s311, 6
        %s313 = smul.addr %s312, 4
        %s314 = scalar_lea.vmem %s0, %s313
      $region48: #{upsample_forward.1} parent=43 // pred_fallthru
        _
      // Predicated region
      $region49: #{upsample_forward.1} parent=43 // pred_check
        %p315 = pneg %p62
      $region50: #{upsample_forward.1} parent=43 // pred_check_branch
        %317 = sbr.rel (%p315) target = $region52
      $region51: #{upsample_forward.1} parent=43 // pred_region
        %p318 = scmp.lt.s32.totalorder %s16, 1
        %s319 = scalar_select %p318, %s16, 1
        %s320 = smul.addr %s319, 3
        %s321 = smul.addr %s320, 2
        %s322 = scalar_lea.vmem %s1, %s321
      $region52: #{upsample_forward.1} parent=43 // pred_fallthru
        _
      // Predicated region
      $region53: #{upsample_forward.1} parent=43 // pred_check
        %p323 = pneg %p88
      $region54: #{upsample_forward.1} parent=43 // pred_check_branch
        %325 = sbr.rel (%p323) target = $region56
      $region55: #{upsample_forward.1} parent=43 // pred_region
        %p326 = scmp.lt.s32.totalorder %s16, 1
        %s327 = scalar_select %p326, %s16, 1
        %s328 = smul.addr %s327, 4
        %s329 = scalar_lea.vmem %s2, %s328
      $region56: #{upsample_forward.1} parent=43 // pred_fallthru
        _
    $region44: #{upsample_forward.1} parent=5 // pred_fallthru
      _
    %p330 = scmp.le.s32.totalorder 1, %s16
    %p331 = scmp.lt.s32.totalorder %s16, 3
    %p332 = pnand %p330, %p331
    %p333 = pneg %p332
    // Predicated region
    $region57: #{upsample_forward.1} parent=5 // pred_check
      _
    $region58: #{upsample_forward.1} parent=5 // pred_check_branch
      %335 = sbr.rel (%p332) target = $region60
    $region59: #{upsample_forward.1} parent=5 // pred_region
      %s336 = ssub.s32 %s16, 1
      %p337 = scmp.lt.s32.totalorder %s21, 1
      %s338 = scalar_select %p337, %s21, 1
      %s339 = smul.addr %s338, 6
      %s340 = smul.addr %s339, 4
      %s341 = scalar_lea.vmem %s0, %s340
      %p342 = pneg %p42
      %p343 = pneg %p39
      %p344 = scmp.lt.s32.totalorder %s21, 1
      %s345 = scalar_select %p344, %s21, 1
      %s346 = smul.addr %s345, 3
      %s347 = smul.addr %s346, 2
      %s348 = scalar_lea.vmem %s1, %s347
      %p349 = pneg %p68
      %p350 = pneg %p65
      %p351 = scmp.lt.s32.totalorder %s21, 1
      %s352 = scalar_select %p351, %s21, 1
      %s353 = smul.addr %s352, 4
      %s354 = scalar_lea.vmem %s2, %s353
      %p355 = pneg %p94
      %p356 = pneg %p91
      %p357 = pneg %p115
      %p358 = pneg %p112
      %p359 = pneg %p136
      %p360 = pneg %p133
      %p361 = pneg %p157
      %p362 = pneg %p154
      %p363 = pneg %p178
      %p364 = pneg %p175
      %p365 = pneg %p199
      %p366 = pneg %p196
      %p367 = pneg %p220
      %p368 = pneg %p217
      %p369 = pneg %p241
      %p370 = pneg %p238
      %p371 = pneg %p267
      %p372 = pneg %p264
      %p373 = scmp.lt.s32.totalorder %s21, 1
      %s374 = scalar_select %p373, %s21, 1
      %s375 = smul.addr %s374, 2
      %s376 = smul.addr %s375, 4
      %s377 = scalar_lea.vmem %s10, %s376
      %p378 = scmp.lt.s32.totalorder %s21, 1
      %s379 = scalar_select %p378, %s21, 1
      %s380 = smul.addr %s379, 6
      %s381 = smul.addr %s380, 4
      %s382 = scalar_lea.vmem %s0, %s381
      %p383 = scmp.lt.s32.totalorder %s21, 1
      %s384 = scalar_select %p383, %s21, 1
      %s385 = smul.addr %s384, 3
      %s386 = smul.addr %s385, 2
      %s387 = scalar_lea.vmem %s1, %s386
      %p388 = scmp.lt.s32.totalorder %s21, 1
      %s389 = scalar_select %p388, %s21, 1
      %s390 = smul.addr %s389, 4
      %s391 = scalar_lea.vmem %s2, %s390
      %p392 = scmp.lt.s32.totalorder %s21, 1
      %s393 = scalar_select %p392, %s21, 1
      %s394 = smul.addr %s393, 2
      %s395 = smul.addr %s394, 4
      %s396 = scalar_lea.vmem %s10, %s395
      %v398 = vld [vmem:[%s3] sm:$0x7]
      %vm399 = vcmp.gt.f32.partialorder %v398, 0.0
      %v400 = vld [vmem:[%s391] sm:$0xf]
      %v401 = vld [vmem:[%s382] sm:$0xff]
      %v402 = vld [vmem:[%s382 + $0x8] sm:$0xf]
      %v403 = vld [vmem:[%s382 + $0xc] sm:$0x33]
      %v404 = vld [vmem:[%s382 + $0x14] sm:$0x3]
      %409 = vrot.lane.b32.xlu0 %v401, 20
      %v410 = vpop.permute.xlu0 %409
      %411 = vrot.lane.b32.xlu0 %v402, 20
      %v412 = vpop.permute.xlu0 %411
      %413 = vrot.lane.b32.xlu0 %v403, 20
      %v414 = vpop.permute.xlu0 %413
      %415 = vrot.lane.b32.xlu0 %v404, 20
      %v416 = vpop.permute.xlu0 %415
      %v417 = vrot.slane %v410, 4
      %v418 = vrot.slane %v414, 4
      %vm419 = vcmask 162816
      %v420 = vsel %vm419, %v417, %v410
      %v421 = vsel %vm419, %v417, %v412
      %v422 = vsel %vm419, %v418, %v414
      %v423 = vsel %vm419, %v418, %v416
      %vm428 = vcmask 1043616
      %vm429 = vcmask 1047556
      %vm430 = vmor %vm429, %vm428
      %431 = vst.msk [vmem:[#allocation4] sm:$0xff] %vm430, %v420
      %vm432 = vcmask 855040
      %433 = vst.msk [vmem:[#allocation4 + $0x8] sm:$0xf] %vm432, %v421
      %vm434 = vcmask 1041568
      %vm435 = vcmask 1045508
      %vm436 = vmor %vm435, %vm434
      %437 = vst.msk [vmem:[#allocation4 + $0xc] sm:$0x33] %vm436, %v422
      %vm438 = vcmask 852992
      %439 = vst.msk [vmem:[#allocation4 + $0x14] sm:$0x3] %vm438, %v423
      %v440 = vld [vmem:[%s382] sm:$0xff]
      %v441 = vld [vmem:[%s382 + $0x8] sm:$0xf]
      %v442 = vld [vmem:[%s382 + $0xc] sm:$0x33]
      %v443 = vld [vmem:[%s382 + $0x14] sm:$0x3]
      %vm448 = vcmask 1041408
      %vm449 = vcmask 1045508
      %vm450 = vmor %vm448, %vm449
      %v451 = vrot.slane %v440, 6
      %v452 = vrot.slane %v441, 6
      %v453 = vrot.slane %v451, 4
      %v454 = vrot.slane %v442, 6
      %v455 = vsel %vm450, %v453, %v454
      %v456 = vrot.slane %v452, 4
      %v457 = vrot.slane %v443, 6
      %v458 = vsel %vm450, %v456, %v457
      %459 = vrot.lane.b32.xlu0 %v451, 19
      %v460 = vpop.permute.xlu0 %459
      %461 = vrot.lane.b32.xlu0 %v452, 19
      %v462 = vpop.permute.xlu0 %461
      %463 = vrot.lane.b32.xlu0 %v455, 19
      %v464 = vpop.permute.xlu0 %463
      %465 = vrot.lane.b32.xlu0 %v458, 19
      %v466 = vpop.permute.xlu0 %465
      %v467 = vrot.slane %v460, 4
      %v468 = vrot.slane %v464, 4
      %vm469 = vcmask 154624
      %v470 = vsel %vm469, %v467, %v460
      %v471 = vsel %vm469, %v467, %v462
      %v472 = vsel %vm469, %v468, %v464
      %v473 = vsel %vm469, %v468, %v466
      %vm478 = vcmask 1043610
      %vm479 = vcmask 1047558
      %vm480 = vmor %vm479, %vm478
      %481 = vst.msk [vmem:[#allocation4 + $0xc] sm:$0xcc] %vm480, %v470
      %vm482 = vcmask 855042
      %483 = vst.msk [vmem:[#allocation4 + $0x14] sm:$0xc] %vm482, %v471
      %vm484 = vcmask 1043608
      %vm485 = vmor %vm429, %vm484
      %486 = vst.msk [vmem:[#allocation4 + $0x18] sm:$0xff] %vm485, %v472
      %487 = vst.msk [vmem:[#allocation4 + $0x20] sm:$0xf] %vm432, %v473
      %v488 = vld [vmem:[%s382] sm:$0xff]
      %v489 = vld [vmem:[%s382 + $0x8] sm:$0xf]
      %v490 = vld [vmem:[%s382 + $0xc] sm:$0x33]
      %v491 = vld [vmem:[%s382 + $0x14] sm:$0x3]
      %496 = vrot.lane.b32.xlu0 %v488, 18
      %v497 = vpop.permute.xlu0 %496
      %498 = vrot.lane.b32.xlu0 %v489, 18
      %v499 = vpop.permute.xlu0 %498
      %500 = vrot.lane.b32.xlu0 %v490, 18
      %v501 = vpop.permute.xlu0 %500
      %502 = vrot.lane.b32.xlu0 %v491, 18
      %v503 = vpop.permute.xlu0 %502
      %v504 = vrot.slane %v497, 4
      %v505 = vrot.slane %v501, 4
      %vm506 = vcmask 146432
      %v507 = vsel %vm506, %v504, %v497
      %v508 = vsel %vm506, %v504, %v499
      %v509 = vsel %vm506, %v505, %v501
      %v510 = vsel %vm506, %v505, %v503
      %vm515 = vcmask 1043600
      %vm516 = vmor %vm429, %vm515
      %517 = vst.msk [vmem:[#allocation4 + $0x24] sm:$0xff] %vm516, %v507
      %518 = vst.msk [vmem:[#allocation4 + $0x2c] sm:$0xf] %vm432, %v508
      %vm519 = vcmask 1041552
      %vm520 = vmor %vm435, %vm519
      %521 = vst.msk [vmem:[#allocation4 + $0x30] sm:$0x33] %vm520, %v509
      %522 = vst.msk [vmem:[#allocation4 + $0x38] sm:$0x3] %vm438, %v510
      %v523 = vld [vmem:[%s382] sm:$0xff]
      %v524 = vld [vmem:[%s382 + $0x8] sm:$0xf]
      %v525 = vld [vmem:[%s382 + $0xc] sm:$0x33]
      %v526 = vld [vmem:[%s382 + $0x14] sm:$0x3]
      %v531 = vrot.slane %v523, 6
      %v532 = vrot.slane %v524, 6
      %v533 = vrot.slane %v531, 4
      %v534 = vrot.slane %v525, 6
      %v535 = vsel %vm450, %v533, %v534
      %v536 = vrot.slane %v532, 4
      %v537 = vrot.slane %v526, 6
      %v538 = vsel %vm450, %v536, %v537
      %539 = vrot.lane.b32.xlu0 %v531, 17
      %v540 = vpop.permute.xlu0 %539
      %541 = vrot.lane.b32.xlu0 %v532, 17
      %v542 = vpop.permute.xlu0 %541
      %543 = vrot.lane.b32.xlu0 %v535, 17
      %v544 = vpop.permute.xlu0 %543
      %545 = vrot.lane.b32.xlu0 %v538, 17
      %v546 = vpop.permute.xlu0 %545
      %v547 = vrot.slane %v540, 4
      %v548 = vrot.slane %v544, 4
      %vm549 = vcmask 138240
      %v550 = vsel %vm549, %v547, %v540
      %v551 = vsel %vm549, %v547, %v542
      %v552 = vsel %vm549, %v548, %v544
      %v553 = vsel %vm549, %v548, %v546
      %vm558 = vcmask 1043594
      %vm559 = vmor %vm479, %vm558
      %560 = vst.msk [vmem:[#allocation4 + $0x30] sm:$0xcc] %vm559, %v550
      %561 = vst.msk [vmem:[#allocation4 + $0x38] sm:$0xc] %vm482, %v551
      %vm562 = vcmask 1043592
      %vm563 = vmor %vm429, %vm562
      %564 = vst.msk [vmem:[#allocation4 + $0x3c] sm:$0xff] %vm563, %v552
      %565 = vst.msk [vmem:[#allocation4 + $0x44] sm:$0xf] %vm432, %v553
      %v566 = vld [vmem:[%s382] sm:$0xff]
      %v567 = vld [vmem:[%s382 + $0x8] sm:$0xf]
      %v568 = vld [vmem:[%s382 + $0xc] sm:$0x33]
      %v569 = vld [vmem:[%s382 + $0x14] sm:$0x3]
      %574 = vrot.lane.b32.xlu0 %v566, 1
      %v575 = vpop.permute.xlu0 %574
      %576 = vrot.lane.b32.xlu0 %v567, 1
      %v577 = vpop.permute.xlu0 %576
      %578 = vrot.lane.b32.xlu0 %v568, 1
      %v579 = vpop.permute.xlu0 %578
      %580 = vrot.lane.b32.xlu0 %v569, 1
      %v581 = vpop.permute.xlu0 %580
      %v582 = vrot.slane %v575, 4
      %v583 = vrot.slane %v579, 4
      %vm584 = vcmask 7168
      %v585 = vsel %vm584, %v582, %v575
      %v586 = vsel %vm584, %v582, %v577
      %v587 = vsel %vm584, %v583, %v579
      %v588 = vsel %vm584, %v583, %v581
      %vm593 = vcmask 1043464
      %vm594 = vmor %vm429, %vm593
      %595 = vst.msk [vmem:[#allocation4 + $0x48] sm:$0xff] %vm594, %v585
      %596 = vst.msk [vmem:[#allocation4 + $0x50] sm:$0xf] %vm432, %v586
      %vm597 = vcmask 1041416
      %vm598 = vmor %vm435, %vm597
      %599 = vst.msk [vmem:[#allocation4 + $0x54] sm:$0x33] %vm598, %v587
      %600 = vst.msk [vmem:[#allocation4 + $0x5c] sm:$0x3] %vm438, %v588
      %v601 = vld [vmem:[%s382] sm:$0xff]
      %v602 = vld [vmem:[%s382 + $0x8] sm:$0xf]
      %v603 = vld [vmem:[%s382 + $0xc] sm:$0x33]
      %v604 = vld [vmem:[%s382 + $0x14] sm:$0x3]
      %v609 = vrot.slane %v601, 6
      %v610 = vrot.slane %v602, 6
      %v611 = vrot.slane %v609, 4
      %v612 = vrot.slane %v603, 6
      %v613 = vsel %vm450, %v611, %v612
      %v614 = vrot.slane %v610, 4
      %v615 = vrot.slane %v604, 6
      %v616 = vsel %vm450, %v614, %v615
      %621 = vst [vmem:[#allocation4 + $0x54] sm:$0xcc] %v609
      %622 = vst.msk [vmem:[#allocation4 + $0x5c] sm:$0xc] %vm482, %v610
      %623 = vst [vmem:[#allocation4 + $0x60] sm:$0xff] %v613
      %624 = vst.msk [vmem:[#allocation4 + $0x68] sm:$0xf] %vm432, %v616
      %v625 = vld [vmem:[%s382] sm:$0xff]
      %v626 = vld [vmem:[%s382 + $0x8] sm:$0xf]
      %v627 = vld [vmem:[%s382 + $0xc] sm:$0x33]
      %v628 = vld [vmem:[%s382 + $0x14] sm:$0x3]
      %633 = vrot.lane.b32.xlu0 %v625, 127
      %v634 = vpop.permute.xlu0 %633
      %635 = vrot.lane.b32.xlu0 %v626, 127
      %v636 = vpop.permute.xlu0 %635
      %637 = vrot.lane.b32.xlu0 %v627, 127
      %v638 = vpop.permute.xlu0 %637
      %639 = vrot.lane.b32.xlu0 %v628, 127
      %v640 = vpop.permute.xlu0 %639
      %v641 = vrot.slane %v634, 4
      %v642 = vrot.slane %v636, 4
      %v643 = vrot.slane %v638, 4
      %v644 = vrot.slane %v640, 4
      %vm645 = vcmask 1043456
      %v646 = vsel %vm645, %v641, %v642
      %vm647 = vcmask 1039360
      %v648 = vsel %vm647, %v634, %v646
      %v649 = vsel %vm645, %v643, %v644
      %v650 = vsel %vm647, %v638, %v649
      %655 = vst [vmem:[#allocation4 + $0x6c] sm:$0xff] %v648
      %vm656 = vcmask 846848
      %657 = vst.msk [vmem:[#allocation4 + $0x74] sm:$0xf] %vm656, %v636
      %658 = vst [vmem:[#allocation4 + $0x78] sm:$0x33] %v650
      %vm659 = vcmask 844800
      %660 = vst.msk [vmem:[#allocation4 + $0x80] sm:$0x3] %vm659, %v640
      %v661 = vld [vmem:[%s382] sm:$0xff]
      %v662 = vld [vmem:[%s382 + $0x8] sm:$0xf]
      %v663 = vld [vmem:[%s382 + $0xc] sm:$0x33]
      %v664 = vld [vmem:[%s382 + $0x14] sm:$0x3]
      %v669 = vrot.slane %v661, 6
      %v670 = vrot.slane %v662, 6
      %v671 = vrot.slane %v669, 4
      %v672 = vrot.slane %v663, 6
      %v673 = vsel %vm450, %v671, %v672
      %v674 = vrot.slane %v670, 4
      %v675 = vrot.slane %v664, 6
      %v676 = vsel %vm450, %v674, %v675
      %677 = vrot.lane.b32.xlu0 %v669, 126
      %v678 = vpop.permute.xlu0 %677
      %679 = vrot.lane.b32.xlu0 %v670, 126
      %v680 = vpop.permute.xlu0 %679
      %681 = vrot.lane.b32.xlu0 %v673, 126
      %v682 = vpop.permute.xlu0 %681
      %683 = vrot.lane.b32.xlu0 %v676, 126
      %v684 = vpop.permute.xlu0 %683
      %v685 = vrot.slane %v678, 4
      %v686 = vrot.slane %v680, 4
      %v687 = vrot.slane %v682, 4
      %v688 = vrot.slane %v684, 4
      %v689 = vsel %vm645, %v685, %v686
      %vm690 = vcmask 1031168
      %v691 = vsel %vm690, %v678, %v689
      %v692 = vsel %vm645, %v687, %v688
      %v693 = vsel %vm690, %v682, %v692
      %698 = vst [vmem:[#allocation4 + $0x78] sm:$0xcc] %v691
      %vm699 = vcmask 838658
      %700 = vst.msk [vmem:[#allocation4 + $0x80] sm:$0xc] %vm699, %v680
      %701 = vst [vmem:[#allocation4 + $0x84] sm:$0xff] %v693
      %vm702 = vcmask 838656
      %703 = vst.msk [vmem:[#allocation4 + $0x8c] sm:$0xf] %vm702, %v684
      %v704 = vld [vmem:[%s382] sm:$0xff]
      %v705 = vld [vmem:[%s382 + $0x8] sm:$0xf]
      %v706 = vld [vmem:[%s382 + $0xc] sm:$0x33]
      %v707 = vld [vmem:[%s382 + $0x14] sm:$0x3]
      %712 = vrot.lane.b32.xlu0 %v704, 110
      %v713 = vpop.permute.xlu0 %712
      %714 = vrot.lane.b32.xlu0 %v705, 110
      %v715 = vpop.permute.xlu0 %714
      %716 = vrot.lane.b32.xlu0 %v706, 110
      %v717 = vpop.permute.xlu0 %716
      %718 = vrot.lane.b32.xlu0 %v707, 110
      %v719 = vpop.permute.xlu0 %718
      %v720 = vrot.slane %v713, 4
      %v721 = vrot.slane %v715, 4
      %v722 = vrot.slane %v717, 4
      %v723 = vrot.slane %v719, 4
      %v724 = vsel %vm645, %v720, %v721
      %vm725 = vcmask 900096
      %v726 = vsel %vm725, %v713, %v724
      %v727 = vsel %vm645, %v722, %v723
      %v728 = vsel %vm725, %v717, %v727
      %733 = vst [vmem:[#allocation4 + $0x90] sm:$0xff] %v726
      %vm734 = vcmask 707584
      %735 = vst.msk [vmem:[#allocation4 + $0x98] sm:$0xf] %vm734, %v715
      %736 = vst [vmem:[#allocation4 + $0x9c] sm:$0x33] %v728
      %vm737 = vcmask 705536
      %738 = vst.msk [vmem:[#allocation4 + $0xa4] sm:$0x3] %vm737, %v719
      %v739 = vld [vmem:[%s382] sm:$0xff]
      %v740 = vld [vmem:[%s382 + $0x8] sm:$0xf]
      %v741 = vld [vmem:[%s382 + $0xc] sm:$0x33]
      %v742 = vld [vmem:[%s382 + $0x14] sm:$0x3]
      %v747 = vrot.slane %v739, 6
      %v748 = vrot.slane %v740, 6
      %v749 = vrot.slane %v747, 4
      %v750 = vrot.slane %v741, 6
      %v751 = vsel %vm450, %v749, %v750
      %v752 = vrot.slane %v748, 4
      %v753 = vrot.slane %v742, 6
      %v754 = vsel %vm450, %v752, %v753
      %755 = vrot.lane.b32.xlu0 %v747, 109
      %v756 = vpop.permute.xlu0 %755
      %757 = vrot.lane.b32.xlu0 %v748, 109
      %v758 = vpop.permute.xlu0 %757
      %759 = vrot.lane.b32.xlu0 %v751, 109
      %v760 = vpop.permute.xlu0 %759
      %761 = vrot.lane.b32.xlu0 %v754, 109
      %v762 = vpop.permute.xlu0 %761
      %v763 = vrot.slane %v756, 4
      %v764 = vrot.slane %v758, 4
      %v765 = vrot.slane %v760, 4
      %v766 = vrot.slane %v762, 4
      %v767 = vsel %vm645, %v763, %v764
      %vm768 = vcmask 891904
      %v769 = vsel %vm768, %v756, %v767
      %v770 = vsel %vm645, %v765, %v766
      %v771 = vsel %vm768, %v760, %v770
      %776 = vst [vmem:[#allocation4 + $0x9c] sm:$0xcc] %v769
      %vm777 = vcmask 699394
      %778 = vst.msk [vmem:[#allocation4 + $0xa4] sm:$0xc] %vm777, %v758
      %779 = vst [vmem:[#allocation4 + $0xa8] sm:$0xff] %v771
      %vm780 = vcmask 699392
      %781 = vst.msk [vmem:[#allocation4 + $0xb0] sm:$0xf] %vm780, %v762
      %v782 = vld [vmem:[%s382] sm:$0xff]
      %v783 = vld [vmem:[%s382 + $0x8] sm:$0xf]
      %v784 = vld [vmem:[%s382 + $0xc] sm:$0x33]
      %v785 = vld [vmem:[%s382 + $0x14] sm:$0x3]
      %790 = vrot.lane.b32.xlu0 %v782, 108
      %v791 = vpop.permute.xlu0 %790
      %792 = vrot.lane.b32.xlu0 %v783, 108
      %v793 = vpop.permute.xlu0 %792
      %794 = vrot.lane.b32.xlu0 %v784, 108
      %v795 = vpop.permute.xlu0 %794
      %796 = vrot.lane.b32.xlu0 %v785, 108
      %v797 = vpop.permute.xlu0 %796
      %v798 = vrot.slane %v791, 4
      %v799 = vrot.slane %v793, 4
      %v800 = vrot.slane %v795, 4
      %v801 = vrot.slane %v797, 4
      %v802 = vsel %vm645, %v798, %v799
      %vm803 = vcmask 883712
      %v804 = vsel %vm803, %v791, %v802
      %v805 = vsel %vm645, %v800, %v801
      %v806 = vsel %vm803, %v795, %v805
      %811 = vst [vmem:[#allocation4 + $0xb4] sm:$0xff] %v804
      %vm812 = vcmask 691200
      %813 = vst.msk [vmem:[#allocation4 + $0xbc] sm:$0xf] %vm812, %v793
      %814 = vst [vmem:[#allocation4 + $0xc0] sm:$0x33] %v806
      %vm815 = vcmask 689152
      %816 = vst.msk [vmem:[#allocation4 + $0xc8] sm:$0x3] %vm815, %v797
      %v817 = vld [vmem:[%s382] sm:$0xff]
      %v818 = vld [vmem:[%s382 + $0x8] sm:$0xf]
      %v819 = vld [vmem:[%s382 + $0xc] sm:$0x33]
      %v820 = vld [vmem:[%s382 + $0x14] sm:$0x3]
      %v825 = vrot.slane %v817, 6
      %v826 = vrot.slane %v818, 6
      %v827 = vrot.slane %v825, 4
      %v828 = vrot.slane %v819, 6
      %v829 = vsel %vm450, %v827, %v828
      %v830 = vrot.slane %v826, 4
      %v831 = vrot.slane %v820, 6
      %v832 = vsel %vm450, %v830, %v831
      %833 = vrot.lane.b32.xlu0 %v825, 107
      %v834 = vpop.permute.xlu0 %833
      %835 = vrot.lane.b32.xlu0 %v826, 107
      %v836 = vpop.permute.xlu0 %835
      %837 = vrot.lane.b32.xlu0 %v829, 107
      %v838 = vpop.permute.xlu0 %837
      %839 = vrot.lane.b32.xlu0 %v832, 107
      %v840 = vpop.permute.xlu0 %839
      %v841 = vrot.slane %v834, 4
      %v842 = vrot.slane %v836, 4
      %v843 = vrot.slane %v838, 4
      %v844 = vrot.slane %v840, 4
      %v845 = vsel %vm645, %v841, %v842
      %vm846 = vcmask 875520
      %v847 = vsel %vm846, %v834, %v845
      %v848 = vsel %vm645, %v843, %v844
      %v849 = vsel %vm846, %v838, %v848
      %854 = vst [vmem:[#allocation4 + $0xc0] sm:$0xcc] %v847
      %vm855 = vcmask 683010
      %856 = vst.msk [vmem:[#allocation4 + $0xc8] sm:$0xc] %vm855, %v836
      %857 = vst [vmem:[#allocation4 + $0xcc] sm:$0xff] %v849
      %vm858 = vcmask 683008
      %859 = vst.msk [vmem:[#allocation4 + $0xd4] sm:$0xf] %vm858, %v840
      %v860 = vld [vmem:[%s382] sm:$0xff]
      %v861 = vld [vmem:[%s382 + $0x8] sm:$0xf]
      %v862 = vld [vmem:[%s382 + $0xc] sm:$0x33]
      %v863 = vld [vmem:[%s382 + $0x14] sm:$0x3]
      %868 = vrot.lane.b32.xlu0 %v860, 91
      %v869 = vpop.permute.xlu0 %868
      %870 = vrot.lane.b32.xlu0 %v861, 91
      %v871 = vpop.permute.xlu0 %870
      %872 = vrot.lane.b32.xlu0 %v862, 91
      %v873 = vpop.permute.xlu0 %872
      %874 = vrot.lane.b32.xlu0 %v863, 91
      %v875 = vpop.permute.xlu0 %874
      %v876 = vrot.slane %v869, 4
      %v877 = vrot.slane %v871, 4
      %v878 = vrot.slane %v873, 4
      %v879 = vrot.slane %v875, 4
      %v880 = vsel %vm645, %v876, %v877
      %vm881 = vcmask 744448
      %v882 = vsel %vm881, %v869, %v880
      %v883 = vsel %vm645, %v878, %v879
      %v884 = vsel %vm881, %v873, %v883
      %889 = vst [vmem:[#allocation4 + $0xd8] sm:$0xff] %v882
      %vm890 = vcmask 551936
      %891 = vst.msk [vmem:[#allocation4 + $0xe0] sm:$0xf] %vm890, %v871
      %892 = vst [vmem:[#allocation4 + $0xe4] sm:$0x33] %v884
      %vm893 = vcmask 549888
      %894 = vst.msk [vmem:[#allocation4 + $0xec] sm:$0x3] %vm893, %v875
      %v895 = vld [vmem:[%s382] sm:$0xff]
      %v896 = vld [vmem:[%s382 + $0x8] sm:$0xf]
      %v897 = vld [vmem:[%s382 + $0xc] sm:$0x33]
      %v898 = vld [vmem:[%s382 + $0x14] sm:$0x3]
      %v903 = vrot.slane %v895, 6
      %v904 = vrot.slane %v896, 6
      %v905 = vrot.slane %v903, 4
      %v906 = vrot.slane %v897, 6
      %v907 = vsel %vm450, %v905, %v906
      %v908 = vrot.slane %v904, 4
      %v909 = vrot.slane %v898, 6
      %v910 = vsel %vm450, %v908, %v909
      %911 = vrot.lane.b32.xlu0 %v903, 90
      %v912 = vpop.permute.xlu0 %911
      %913 = vrot.lane.b32.xlu0 %v904, 90
      %v914 = vpop.permute.xlu0 %913
      %915 = vrot.lane.b32.xlu0 %v907, 90
      %v916 = vpop.permute.xlu0 %915
      %917 = vrot.lane.b32.xlu0 %v910, 90
      %v918 = vpop.permute.xlu0 %917
      %v919 = vrot.slane %v912, 4
      %v920 = vrot.slane %v914, 4
      %v921 = vrot.slane %v916, 4
      %v922 = vrot.slane %v918, 4
      %v923 = vsel %vm645, %v919, %v920
      %vm924 = vcmask 736256
      %v925 = vsel %vm924, %v912, %v923
      %v926 = vsel %vm645, %v921, %v922
      %v927 = vsel %vm924, %v916, %v926
      %932 = vst [vmem:[#allocation4 + $0xe4] sm:$0xcc] %v925
      %vm933 = vcmask 543746
      %934 = vst.msk [vmem:[#allocation4 + $0xec] sm:$0xc] %vm933, %v914
      %935 = vst [vmem:[#allocation4 + $0xf0] sm:$0xff] %v927
      %vm936 = vcmask 543744
      %937 = vst.msk [vmem:[#allocation4 + $0xf8] sm:$0xf] %vm936, %v918
      %v938 = vld [vmem:[%s382] sm:$0xff]
      %v939 = vld [vmem:[%s382 + $0x8] sm:$0xf]
      %v940 = vld [vmem:[%s382 + $0xc] sm:$0x33]
      %v941 = vld [vmem:[%s382 + $0x14] sm:$0x3]
      %946 = vrot.lane.b32.xlu0 %v938, 89
      %v947 = vpop.permute.xlu0 %946
      %948 = vrot.lane.b32.xlu0 %v939, 89
      %v949 = vpop.permute.xlu0 %948
      %950 = vrot.lane.b32.xlu0 %v940, 89
      %v951 = vpop.permute.xlu0 %950
      %952 = vrot.lane.b32.xlu0 %v941, 89
      %v953 = vpop.permute.xlu0 %952
      %v954 = vrot.slane %v947, 4
      %v955 = vrot.slane %v949, 4
      %v956 = vrot.slane %v951, 4
      %v957 = vrot.slane %v953, 4
      %v958 = vsel %vm645, %v954, %v955
      %vm959 = vcmask 728064
      %v960 = vsel %vm959, %v947, %v958
      %v961 = vsel %vm645, %v956, %v957
      %v962 = vsel %vm959, %v951, %v961
      %967 = vst [vmem:[#allocation4 + $0xfc] sm:$0xff] %v960
      %vm968 = vcmask 535552
      %969 = vst.msk [vmem:[#allocation4 + $0x104] sm:$0xf] %vm968, %v949
      %970 = vst [vmem:[#allocation4 + $0x108] sm:$0x33] %v962
      %vm971 = vcmask 533504
      %972 = vst.msk [vmem:[#allocation4 + $0x110] sm:$0x3] %vm971, %v953
      %v973 = vld [vmem:[%s382] sm:$0xff]
      %v974 = vld [vmem:[%s382 + $0x8] sm:$0xf]
      %v975 = vld [vmem:[%s382 + $0xc] sm:$0x33]
      %v976 = vld [vmem:[%s382 + $0x14] sm:$0x3]
      %v981 = vrot.slane %v973, 6
      %v982 = vrot.slane %v974, 6
      %v983 = vrot.slane %v981, 4
      %v984 = vrot.slane %v975, 6
      %v985 = vsel %vm450, %v983, %v984
      %v986 = vrot.slane %v982, 4
      %v987 = vrot.slane %v976, 6
      %v988 = vsel %vm450, %v986, %v987
      %989 = vrot.lane.b32.xlu0 %v981, 88
      %v990 = vpop.permute.xlu0 %989
      %991 = vrot.lane.b32.xlu0 %v982, 88
      %v992 = vpop.permute.xlu0 %991
      %993 = vrot.lane.b32.xlu0 %v985, 88
      %v994 = vpop.permute.xlu0 %993
      %995 = vrot.lane.b32.xlu0 %v988, 88
      %v996 = vpop.permute.xlu0 %995
      %v997 = vrot.slane %v990, 4
      %v998 = vrot.slane %v992, 4
      %v999 = vrot.slane %v994, 4
      %v1000 = vrot.slane %v996, 4
      %v1001 = vsel %vm645, %v997, %v998
      %vm1002 = vcmask 719872
      %v1003 = vsel %vm1002, %v990, %v1001
      %v1004 = vsel %vm645, %v999, %v1000
      %v1005 = vsel %vm1002, %v994, %v1004
      %1010 = vst [vmem:[#allocation4 + $0x108] sm:$0xcc] %v1003
      %vm1011 = vcmask 527362
      %1012 = vst.msk [vmem:[#allocation4 + $0x110] sm:$0xc] %vm1011, %v992
      %1013 = vst [vmem:[#allocation4 + $0x114] sm:$0xff] %v1005
      %vm1014 = vcmask 527360
      %1015 = vst.msk [vmem:[#allocation4 + $0x11c] sm:$0xf] %vm1014, %v996
      %v1016 = vld [vmem:[%s4] sm:$0xf]
      %v1017 = vld [vmem:[#allocation4] sm:$0xff]
      %v1018 = vld [vmem:[#allocation4 + $0x8] sm:$0xf]
      %v1019 = vld [vmem:[#allocation4 + $0xc] sm:$0xff]
      %v1020 = vld [vmem:[#allocation4 + $0x14] sm:$0xf]
      %v1021 = vld [vmem:[#allocation4 + $0x18] sm:$0xff]
      %v1022 = vld [vmem:[#allocation4 + $0x20] sm:$0xf]
      %v1023 = vld [vmem:[#allocation4 + $0x24] sm:$0xff]
      %v1024 = vld [vmem:[#allocation4 + $0x2c] sm:$0xf]
      %v1025 = vld [vmem:[#allocation4 + $0x30] sm:$0xff]
      %v1026 = vld [vmem:[#allocation4 + $0x38] sm:$0xf]
      %v1027 = vld [vmem:[#allocation4 + $0x3c] sm:$0xff]
      %v1028 = vld [vmem:[#allocation4 + $0x44] sm:$0xf]
      %v1029 = vld [vmem:[#allocation4 + $0x48] sm:$0xff]
      %v1030 = vld [vmem:[#allocation4 + $0x50] sm:$0xf]
      %v1031 = vld [vmem:[#allocation4 + $0x54] sm:$0xff]
      %v1032 = vld [vmem:[#allocation4 + $0x5c] sm:$0xf]
      %v1033 = vld [vmem:[#allocation4 + $0x60] sm:$0xff]
      %v1034 = vld [vmem:[#allocation4 + $0x68] sm:$0xf]
      %v1035 = vld [vmem:[#allocation4 + $0x6c] sm:$0xff]
      %v1036 = vld [vmem:[#allocation4 + $0x74] sm:$0xf]
      %v1037 = vld [vmem:[#allocation4 + $0x78] sm:$0xff]
      %v1038 = vld [vmem:[#allocation4 + $0x80] sm:$0xf]
      %v1039 = vld [vmem:[#allocation4 + $0x84] sm:$0xff]
      %v1040 = vld [vmem:[#allocation4 + $0x8c] sm:$0xf]
      %v1041 = vld [vmem:[#allocation4 + $0x90] sm:$0xff]
      %v1042 = vld [vmem:[#allocation4 + $0x98] sm:$0xf]
      %v1043 = vld [vmem:[#allocation4 + $0x9c] sm:$0xff]
      %v1044 = vld [vmem:[#allocation4 + $0xa4] sm:$0xf]
      %v1045 = vld [vmem:[#allocation4 + $0xa8] sm:$0xff]
      %v1046 = vld [vmem:[#allocation4 + $0xb0] sm:$0xf]
      %v1047 = vld [vmem:[#allocation4 + $0xb4] sm:$0xff]
      %v1048 = vld [vmem:[#allocation4 + $0xbc] sm:$0xf]
      %v1049 = vld [vmem:[#allocation4 + $0xc0] sm:$0xff]
      %v1050 = vld [vmem:[#allocation4 + $0xc8] sm:$0xf]
      %v1051 = vld [vmem:[#allocation4 + $0xcc] sm:$0xff]
      %v1052 = vld [vmem:[#allocation4 + $0xd4] sm:$0xf]
      %v1053 = vld [vmem:[#allocation4 + $0xd8] sm:$0xff]
      %v1054 = vld [vmem:[#allocation4 + $0xe0] sm:$0xf]
      %v1055 = vld [vmem:[#allocation4 + $0xe4] sm:$0xff]
      %v1056 = vld [vmem:[#allocation4 + $0xec] sm:$0xf]
      %v1057 = vld [vmem:[#allocation4 + $0xf0] sm:$0xff]
      %v1058 = vld [vmem:[#allocation4 + $0xf8] sm:$0xf]
      %v1059 = vld [vmem:[#allocation4 + $0xfc] sm:$0xff]
      %v1060 = vld [vmem:[#allocation4 + $0x104] sm:$0xf]
      %v1061 = vld [vmem:[#allocation4 + $0x108] sm:$0xff]
      %v1062 = vld [vmem:[#allocation4 + $0x110] sm:$0xf]
      %v1063 = vld [vmem:[#allocation4 + $0x114] sm:$0xff]
      %v1064 = vld [vmem:[#allocation4 + $0x11c] sm:$0xf]
      %v1065 = vld [vmem:[%s5] sm:$0xf]
      %1067 = vset.pattern.permute.xlu0 0
      %1068 = vperm.xlu0 %1067, %v1065
      %v1069 = vpop.permute.xlu0 %1068
      %v1073 = vunpack.c.l.s4 1983009808
      %v1074 = vunpack.c.0.s8 %v1073
      %v1075 = vlaneseq
      %v1076 = vshrl.u32 %v1075, 7
      %v1077 = vsub.s32 %v1074, %v1076
      %v1078 = vrot.slane %v1016, %v1077
      %v1079 = vcombine.high %v1078, %v1078
      %v1129 = vunpack.c.l.b16 %v1017
      %v1130 = vunpack.c.h.b16 %v1017
      %v1131 = vunpack.c.l.b16 %v1018
      %v1132 = vunpack.c.l.b16 %v1019
      %v1133 = vunpack.c.h.b16 %v1019
      %v1134 = vunpack.c.l.b16 %v1020
      %v1135 = vunpack.c.l.b16 %v1021
      %v1136 = vunpack.c.h.b16 %v1021
      %v1137 = vunpack.c.l.b16 %v1022
      %v1138 = vunpack.c.l.b16 %v1023
      %v1139 = vunpack.c.h.b16 %v1023
      %v1140 = vunpack.c.l.b16 %v1024
      %v1141 = vunpack.c.l.b16 %v1025
      %v1142 = vunpack.c.h.b16 %v1025
      %v1143 = vunpack.c.l.b16 %v1026
      %v1144 = vunpack.c.l.b16 %v1027
      %v1145 = vunpack.c.h.b16 %v1027
      %v1146 = vunpack.c.l.b16 %v1028
      %v1147 = vunpack.c.l.b16 %v1029
      %v1148 = vunpack.c.h.b16 %v1029
      %v1149 = vunpack.c.l.b16 %v1030
      %v1150 = vunpack.c.l.b16 %v1031
      %v1151 = vunpack.c.h.b16 %v1031
      %v1152 = vunpack.c.l.b16 %v1032
      %v1153 = vunpack.c.l.b16 %v1033
      %v1154 = vunpack.c.h.b16 %v1033
      %v1155 = vunpack.c.l.b16 %v1034
      %v1156 = vunpack.c.l.b16 %v1035
      %v1157 = vunpack.c.h.b16 %v1035
      %v1158 = vunpack.c.l.b16 %v1036
      %v1159 = vunpack.c.l.b16 %v1037
      %v1160 = vunpack.c.h.b16 %v1037
      %v1161 = vunpack.c.l.b16 %v1038
      %v1162 = vunpack.c.l.b16 %v1039
      %v1163 = vunpack.c.h.b16 %v1039
      %v1164 = vunpack.c.l.b16 %v1040
      %v1165 = vunpack.c.l.b16 %v1041
      %v1166 = vunpack.c.h.b16 %v1041
      %v1167 = vunpack.c.l.b16 %v1042
      %v1168 = vunpack.c.l.b16 %v1043
      %v1169 = vunpack.c.h.b16 %v1043
      %v1170 = vunpack.c.l.b16 %v1044
      %v1171 = vunpack.c.l.b16 %v1045
      %v1172 = vunpack.c.h.b16 %v1045
      %v1173 = vunpack.c.l.b16 %v1046
      %v1174 = vunpack.c.l.b16 %v1047
      %v1175 = vunpack.c.h.b16 %v1047
      %v1176 = vunpack.c.l.b16 %v1048
      %v1177 = vunpack.c.l.b16 %v1049
      %v1178 = vunpack.c.h.b16 %v1049
      %v1179 = vunpack.c.l.b16 %v1050
      %v1180 = vunpack.c.l.b16 %v1051
      %v1181 = vunpack.c.h.b16 %v1051
      %v1182 = vunpack.c.l.b16 %v1052
      %v1183 = vunpack.c.l.b16 %v1053
      %v1184 = vunpack.c.h.b16 %v1053
      %v1185 = vunpack.c.l.b16 %v1054
      %v1186 = vunpack.c.l.b16 %v1055
      %v1187 = vunpack.c.h.b16 %v1055
      %v1188 = vunpack.c.l.b16 %v1056
      %v1189 = vunpack.c.l.b16 %v1057
      %v1190 = vunpack.c.h.b16 %v1057
      %v1191 = vunpack.c.l.b16 %v1058
      %v1192 = vunpack.c.l.b16 %v1059
      %v1193 = vunpack.c.h.b16 %v1059
      %v1194 = vunpack.c.l.b16 %v1060
      %v1195 = vunpack.c.l.b16 %v1061
      %v1196 = vunpack.c.h.b16 %v1061
      %v1197 = vunpack.c.l.b16 %v1062
      %v1198 = vunpack.c.l.b16 %v1063
      %v1199 = vunpack.c.h.b16 %v1063
      %v1200 = vunpack.c.l.b16 %v1064
      %v1201 = vpack.c.b16 %v1132, %v1129
      %v1202 = vpack.c.b16 %v1133, %v1130
      %v1203 = vpack.c.b16 %v1134, %v1131
      %v1204 = vpack.c.b16 %v1138, %v1135
      %v1205 = vpack.c.b16 %v1139, %v1136
      %v1206 = vpack.c.b16 %v1140, %v1137
      %v1207 = vpack.c.b16 %v1144, %v1141
      %v1208 = vpack.c.b16 %v1145, %v1142
      %v1209 = vpack.c.b16 %v1146, %v1143
      %v1210 = vpack.c.b16 %v1150, %v1147
      %v1211 = vpack.c.b16 %v1151, %v1148
      %v1212 = vpack.c.b16 %v1152, %v1149
      %v1213 = vpack.c.b16 %v1156, %v1153
      %v1214 = vpack.c.b16 %v1157, %v1154
      %v1215 = vpack.c.b16 %v1158, %v1155
      %v1216 = vpack.c.b16 %v1162, %v1159
      %v1217 = vpack.c.b16 %v1163, %v1160
      %v1218 = vpack.c.b16 %v1164, %v1161
      %v1219 = vpack.c.b16 %v1168, %v1165
      %v1220 = vpack.c.b16 %v1169, %v1166
      %v1221 = vpack.c.b16 %v1170, %v1167
      %v1222 = vpack.c.b16 %v1174, %v1171
      %v1223 = vpack.c.b16 %v1175, %v1172
      %v1224 = vpack.c.b16 %v1176, %v1173
      %v1225 = vpack.c.b16 %v1180, %v1177
      %v1226 = vpack.c.b16 %v1181, %v1178
      %v1227 = vpack.c.b16 %v1182, %v1179
      %v1228 = vpack.c.b16 %v1186, %v1183
      %v1229 = vpack.c.b16 %v1187, %v1184
      %v1230 = vpack.c.b16 %v1188, %v1185
      %v1231 = vpack.c.b16 %v1192, %v1189
      %v1232 = vpack.c.b16 %v1193, %v1190
      %v1233 = vpack.c.b16 %v1194, %v1191
      %v1234 = vpack.c.b16 %v1198, %v1195
      %v1235 = vpack.c.b16 %v1199, %v1196
      %v1236 = vpack.c.b16 %v1200, %v1197
      %vm1273 = vcmask 523264
      %v1275 = vsel %vm1273, %v1079, 0
      %1277 = vmatprep.subr.bf16.mxu0 %v1223
      %1278 = vmatpush1.bf16.msra.mxu0 %v1222
      %1279 = vmatprep.subr.bf16.mxu0 %v1220
      %1280 = vmatpush1.bf16.msra.mxu0 %v1219
      %1281 = vmatprep.subr.bf16.mxu0 %v1217
      %1282 = vmatpush1.bf16.msra.mxu0 %v1216
      %1283 = vmatprep.subr.bf16.mxu0 %v1214
      %1284 = vmatpush1.bf16.msra.mxu0 %v1213
      %1285 = vmatprep.subr.bf16.mxu0 %v1211
      %1286 = vmatpush1.bf16.msra.mxu0 %v1210
      %1287 = vmatprep.subr.bf16.mxu0 %v1208
      %1288 = vmatpush1.bf16.msra.mxu0 %v1207
      %1289 = vmatprep.subr.bf16.mxu0 %v1205
      %1290 = vmatpush1.bf16.msra.mxu0 %v1204
      %1291 = vmatprep.subr.bf16.mxu0 %v1202
      %1292 = vmatpush1.bf16.msra.mxu0 %v1201
      %1293 = vmatprep.subr.bf16.mxu0 0
      %1294 = vmatpush2.bf16.msra.mxu0 0
      %1295 = vmatprep.subr.bf16.mxu0 0
      %1296 = vmatpush2.bf16.msra.mxu0 0
      %1297 = vmatprep.subr.bf16.mxu0 0
      %1298 = vmatpush2.bf16.msra.mxu0 0
      %1299 = vmatprep.subr.bf16.mxu0 0
      %1300 = vmatpush2.bf16.msra.mxu0 0
      %1301 = vmatprep.subr.bf16.mxu0 %v1235
      %1302 = vmatpush2.bf16.msra.mxu0 %v1234
      %1303 = vmatprep.subr.bf16.mxu0 %v1232
      %1304 = vmatpush2.bf16.msra.mxu0 %v1231
      %1305 = vmatprep.subr.bf16.mxu0 %v1229
      %1306 = vmatpush2.bf16.msra.mxu0 %v1228
      %1307 = vmatprep.subr.bf16.mxu0 %v1226
      %1308 = vmatpush2.bf16.msra.mxu0 %v1225
      %1309 = vmatprep.mubr.bf16.mxu0 %v1275
      %1310 = vmatmul.mubr.bf16.gmra.mxu0 %v1078
      %v1311 = vpop.f32.mrf.mxu0
      %v1312 = vadd.f32 %v1069, %v1311
      %v1313 = vpop.f32.mrf.mxu0
      %v1314 = vadd.f32 %v1069, %v1313
      %v1315 = vpop.f32.mrf.mxu0
      %v1316 = vpop.f32.mrf.mxu0
      %1317 = vdwg.mxu0
      %1318 = vmatprep.subr.bf16.mxu0 0
      %1319 = vmatpush1.bf16.msra.mxu0 %v1224
      %1320 = vmatprep.subr.bf16.mxu0 0
      %1321 = vmatpush1.bf16.msra.mxu0 %v1221
      %1322 = vmatprep.subr.bf16.mxu0 0
      %1323 = vmatpush1.bf16.msra.mxu0 %v1218
      %1324 = vmatprep.subr.bf16.mxu0 0
      %1325 = vmatpush1.bf16.msra.mxu0 %v1215
      %1326 = vmatprep.subr.bf16.mxu0 0
      %1327 = vmatpush1.bf16.msra.mxu0 %v1212
      %1328 = vmatprep.subr.bf16.mxu0 0
      %1329 = vmatpush1.bf16.msra.mxu0 %v1209
      %1330 = vmatprep.subr.bf16.mxu0 0
      %1331 = vmatpush1.bf16.msra.mxu0 %v1206
      %1332 = vmatprep.subr.bf16.mxu0 0
      %1333 = vmatpush1.bf16.msra.mxu0 %v1203
      %1334 = vmatprep.subr.bf16.mxu0 0
      %1335 = vmatpush2.bf16.msra.mxu0 0
      %1336 = vmatprep.subr.bf16.mxu0 0
      %1337 = vmatpush2.bf16.msra.mxu0 0
      %1338 = vmatprep.subr.bf16.mxu0 0
      %1339 = vmatpush2.bf16.msra.mxu0 0
      %1340 = vmatprep.subr.bf16.mxu0 0
      %1341 = vmatpush2.bf16.msra.mxu0 0
      %1342 = vmatprep.subr.bf16.mxu0 0
      %1343 = vmatpush2.bf16.msra.mxu0 %v1236
      %1344 = vmatprep.subr.bf16.mxu0 0
      %1345 = vmatpush2.bf16.msra.mxu0 %v1233
      %1346 = vmatprep.subr.bf16.mxu0 0
      %1347 = vmatpush2.bf16.msra.mxu0 %v1230
      %1348 = vmatprep.subr.bf16.mxu0 0
      %1349 = vmatpush2.bf16.msra.mxu0 %v1227
      %1350 = vmatprep.mubr.bf16.mxu0 %v1275
      %1351 = vmatmul.mubr.bf16.gmra.mxu0 %v1078
      %v1352 = vpop.f32.mrf.mxu0
      %v1353 = vadd.f32 %v1069, %v1352
      %v1354 = vpop.f32.mrf.mxu0
      %v1355 = vpop.f32.mrf.mxu0
      %v1356 = vpop.f32.mrf.mxu0
      %1357 = vdwg.mxu0
      %v1358 = vmax.f32 %v1312, 0.0
      %v1359 = vmax.f32 %v1314, 0.0
      %v1360 = vmax.f32 %v1353, 0.0
      %v1361 = vsel %vm399, 1, 0
      %v1362 = vlaneseq
      %v1363 = vshrl.u32 %v1362, 7
      %v1364 = vsub.s32 0, %v1363
      %v1365 = vrot.slane %v1361, %v1364
      %v1366 = vlaneseq
      %v1367 = vshrl.u32 %v1366, 7
      %v1368 = vsub.s32 1, %v1367
      %v1369 = vrot.slane %v1361, %v1368
      %v1370 = vlaneseq
      %v1371 = vshrl.u32 %v1370, 7
      %v1372 = vsub.s32 2, %v1371
      %v1373 = vrot.slane %v1361, %v1372
      %vm1374 = vcmp.eq.s32.totalorder %v1365, 1
      %vm1375 = vcmp.eq.s32.totalorder %v1369, 1
      %vm1376 = vcmp.eq.s32.totalorder %v1373, 1
      %v1377 = vsel %vm1374, %v1358, 0.0
      %v1378 = vsel %vm1375, %v1359, 0.0
      %v1379 = vsel %vm1376, %v1360, 0.0
      %v1380 = vpack.c.bf16 %v1377, %v1377
      %v1381 = vpack.c.bf16 %v1378, %v1378
      %v1382 = vpack.c.bf16 %v1379, %v1379
      %v1386 = vunpack.c.l.b16 %v1380
      %v1387 = vunpack.c.l.b16 %v1381
      %v1388 = vunpack.c.l.b16 %v1382
      %v1389 = vpack.c.b16 %v1387, %v1386
      %v1390 = vpack.c.b16 %v1388, %v1388
      %1393 = vst [vmem:[#allocation2] sm:$0x33] %v1389
      %1394 = vst.msk [vmem:[#allocation2 + $0x8] sm:$0x3] %vm438, %v1390
      %v1395 = vld [vmem:[%s387] sm:$0x3f]
      %v1397 = vcombine.low %v1395, %v1395
      %v1399 = vunpack.c.l.s4 1983009808
      %v1400 = vunpack.c.0.s8 %v1399
      %v1401 = vlaneseq
      %v1402 = vshrl.u32 %v1401, 7
      %v1403 = vsub.s32 %v1400, %v1402
      %v1404 = vrot.slane %v1397, %v1403
      %v1406 = vunpack.c.l.s4 1983009808
      %v1407 = vunpack.c.0.s8 %v1406
      %v1408 = vlaneseq
      %v1409 = vshrl.u32 %v1408, 7
      %v1410 = vsub.s32 %v1407, %v1409
      %v1411 = vrot.slane %v1395, %v1410
      %1414 = vst [vmem:[#allocation2] sm:$0xcc] %v1404
      %1415 = vst.msk [vmem:[#allocation2 + $0x8] sm:$0xc] %vm482, %v1411
      %1417 = vset.pattern.permute.xlu0 0
      %1418 = vperm.xlu0 %1417, %v400
      %v1419 = vpop.permute.xlu0 %1418
      %v1421 = vsel %vm1374, %v1419, 0.0
      %v1422 = vsel %vm1375, %v1419, 0.0
      %v1423 = vsel %vm1376, %v1419, 0.0
      %v1424 = vpack.c.bf16 %v1421, %v1421
      %v1425 = vpack.c.bf16 %v1422, %v1422
      %v1426 = vpack.c.bf16 %v1423, %v1423
      %v1430 = vunpack.c.l.b16 %v1424
      %v1431 = vunpack.c.l.b16 %v1425
      %v1432 = vunpack.c.l.b16 %v1426
      %v1433 = vpack.c.b16 %v1431, %v1430
      %v1434 = vpack.c.b16 %v1432, %v1432
      %1437 = vst [vmem:[#allocation2 + $0xc] sm:$0x33] %v1433
      %1438 = vst.msk [vmem:[#allocation2 + $0x14] sm:$0x3] %vm438, %v1434
      %v1439 = vld [vmem:[#allocation2] sm:$0xff]
      %v1440 = vld [vmem:[#allocation2 + $0x8] sm:$0xf]
      %v1441 = vld [vmem:[#allocation2 + $0xc] sm:$0x33]
      %v1442 = vld [vmem:[#allocation2 + $0x14] sm:$0x3]
      %1447 = vrot.lane.b32.xlu0 %v1439, 20
      %v1448 = vpop.permute.xlu0 %1447
      %1449 = vrot.lane.b32.xlu0 %v1440, 20
      %v1450 = vpop.permute.xlu0 %1449
      %1451 = vrot.lane.b32.xlu0 %v1441, 20
      %v1452 = vpop.permute.xlu0 %1451
      %1453 = vrot.lane.b32.xlu0 %v1442, 20
      %v1454 = vpop.permute.xlu0 %1453
      %v1455 = vrot.slane %v1448, 4
      %v1456 = vrot.slane %v1452, 4
      %v1457 = vsel %vm419, %v1455, %v1448
      %v1458 = vsel %vm419, %v1455, %v1450
      %v1459 = vsel %vm419, %v1456, %v1452
      %v1460 = vsel %vm419, %v1456, %v1454
      %1465 = vst.msk [vmem:[#allocation5] sm:$0xff] %vm430, %v1457
      %1466 = vst.msk [vmem:[#allocation5 + $0x8] sm:$0xf] %vm432, %v1458
      %1467 = vst.msk [vmem:[#allocation5 + $0xc] sm:$0x33] %vm436, %v1459
      %1468 = vst.msk [vmem:[#allocation5 + $0x14] sm:$0x3] %vm438, %v1460
      %v1469 = vld [vmem:[#allocation2] sm:$0xff]
      %v1470 = vld [vmem:[#allocation2 + $0x8] sm:$0xf]
      %v1471 = vld [vmem:[#allocation2 + $0xc] sm:$0x33]
      %v1472 = vld [vmem:[#allocation2 + $0x14] sm:$0x3]
      %v1477 = vrot.slane %v1469, 6
      %v1478 = vrot.slane %v1470, 6
      %v1479 = vrot.slane %v1477, 4
      %v1480 = vrot.slane %v1471, 6
      %v1481 = vsel %vm450, %v1479, %v1480
      %v1482 = vrot.slane %v1478, 4
      %v1483 = vrot.slane %v1472, 6
      %v1484 = vsel %vm450, %v1482, %v1483
      %1485 = vrot.lane.b32.xlu0 %v1477, 19
      %v1486 = vpop.permute.xlu0 %1485
      %1487 = vrot.lane.b32.xlu0 %v1478, 19
      %v1488 = vpop.permute.xlu0 %1487
      %1489 = vrot.lane.b32.xlu0 %v1481, 19
      %v1490 = vpop.permute.xlu0 %1489
      %1491 = vrot.lane.b32.xlu0 %v1484, 19
      %v1492 = vpop.permute.xlu0 %1491
      %v1493 = vrot.slane %v1486, 4
      %v1494 = vrot.slane %v1490, 4
      %v1495 = vsel %vm469, %v1493, %v1486
      %v1496 = vsel %vm469, %v1493, %v1488
      %v1497 = vsel %vm469, %v1494, %v1490
      %v1498 = vsel %vm469, %v1494, %v1492
      %1503 = vst.msk [vmem:[#allocation5 + $0xc] sm:$0xcc] %vm480, %v1495
      %1504 = vst.msk [vmem:[#allocation5 + $0x14] sm:$0xc] %vm482, %v1496
      %1505 = vst.msk [vmem:[#allocation5 + $0x18] sm:$0xff] %vm485, %v1497
      %1506 = vst.msk [vmem:[#allocation5 + $0x20] sm:$0xf] %vm432, %v1498
      %v1507 = vld [vmem:[#allocation2] sm:$0xff]
      %v1508 = vld [vmem:[#allocation2 + $0x8] sm:$0xf]
      %v1509 = vld [vmem:[#allocation2 + $0xc] sm:$0x33]
      %v1510 = vld [vmem:[#allocation2 + $0x14] sm:$0x3]
      %1515 = vrot.lane.b32.xlu0 %v1507, 18
      %v1516 = vpop.permute.xlu0 %1515
      %1517 = vrot.lane.b32.xlu0 %v1508, 18
      %v1518 = vpop.permute.xlu0 %1517
      %1519 = vrot.lane.b32.xlu0 %v1509, 18
      %v1520 = vpop.permute.xlu0 %1519
      %1521 = vrot.lane.b32.xlu0 %v1510, 18
      %v1522 = vpop.permute.xlu0 %1521
      %v1523 = vrot.slane %v1516, 4
      %v1524 = vrot.slane %v1520, 4
      %v1525 = vsel %vm506, %v1523, %v1516
      %v1526 = vsel %vm506, %v1523, %v1518
      %v1527 = vsel %vm506, %v1524, %v1520
      %v1528 = vsel %vm506, %v1524, %v1522
      %1533 = vst.msk [vmem:[#allocation5 + $0x24] sm:$0xff] %vm516, %v1525
      %1534 = vst.msk [vmem:[#allocation5 + $0x2c] sm:$0xf] %vm432, %v1526
      %1535 = vst.msk [vmem:[#allocation5 + $0x30] sm:$0x33] %vm520, %v1527
      %1536 = vst.msk [vmem:[#allocation5 + $0x38] sm:$0x3] %vm438, %v1528
      %v1537 = vld [vmem:[#allocation2] sm:$0xff]
      %v1538 = vld [vmem:[#allocation2 + $0x8] sm:$0xf]
      %v1539 = vld [vmem:[#allocation2 + $0xc] sm:$0x33]
      %v1540 = vld [vmem:[#allocation2 + $0x14] sm:$0x3]
      %v1545 = vrot.slane %v1537, 6
      %v1546 = vrot.slane %v1538, 6
      %v1547 = vrot.slane %v1545, 4
      %v1548 = vrot.slane %v1539, 6
      %v1549 = vsel %vm450, %v1547, %v1548
      %v1550 = vrot.slane %v1546, 4
      %v1551 = vrot.slane %v1540, 6
      %v1552 = vsel %vm450, %v1550, %v1551
      %1553 = vrot.lane.b32.xlu0 %v1545, 1
      %v1554 = vpop.permute.xlu0 %1553
      %1555 = vrot.lane.b32.xlu0 %v1546, 1
      %v1556 = vpop.permute.xlu0 %1555
      %1557 = vrot.lane.b32.xlu0 %v1549, 1
      %v1558 = vpop.permute.xlu0 %1557
      %1559 = vrot.lane.b32.xlu0 %v1552, 1
      %v1560 = vpop.permute.xlu0 %1559
      %v1561 = vrot.slane %v1554, 4
      %v1562 = vrot.slane %v1558, 4
      %v1563 = vsel %vm584, %v1561, %v1554
      %v1564 = vsel %vm584, %v1561, %v1556
      %v1565 = vsel %vm584, %v1562, %v1558
      %v1566 = vsel %vm584, %v1562, %v1560
      %vm1571 = vcmask 1043466
      %vm1572 = vmor %vm479, %vm1571
      %1573 = vst.msk [vmem:[#allocation5 + $0x30] sm:$0xcc] %vm1572, %v1563
      %1574 = vst.msk [vmem:[#allocation5 + $0x38] sm:$0xc] %vm482, %v1564
      %1575 = vst.msk [vmem:[#allocation5 + $0x3c] sm:$0xff] %vm594, %v1565
      %1576 = vst.msk [vmem:[#allocation5 + $0x44] sm:$0xf] %vm432, %v1566
      %v1577 = vld [vmem:[#allocation2] sm:$0xff]
      %v1578 = vld [vmem:[#allocation2 + $0x8] sm:$0xf]
      %v1579 = vld [vmem:[#allocation2 + $0xc] sm:$0x33]
      %v1580 = vld [vmem:[#allocation2 + $0x14] sm:$0x3]
      %1581 = vst [vmem:[#allocation5 + $0x48] sm:$0xff] %v1577
      %1582 = vst.msk [vmem:[#allocation5 + $0x50] sm:$0xf] %vm432, %v1578
      %1583 = vst [vmem:[#allocation5 + $0x54] sm:$0x33] %v1579
      %1584 = vst.msk [vmem:[#allocation5 + $0x5c] sm:$0x3] %vm438, %v1580
      %v1585 = vld [vmem:[#allocation2] sm:$0xff]
      %v1586 = vld [vmem:[#allocation2 + $0x8] sm:$0xf]
      %v1587 = vld [vmem:[#allocation2 + $0xc] sm:$0x33]
      %v1588 = vld [vmem:[#allocation2 + $0x14] sm:$0x3]
      %v1593 = vrot.slane %v1585, 6
      %v1594 = vrot.slane %v1586, 6
      %v1595 = vrot.slane %v1593, 4
      %v1596 = vrot.slane %v1587, 6
      %v1597 = vsel %vm450, %v1595, %v1596
      %v1598 = vrot.slane %v1594, 4
      %v1599 = vrot.slane %v1588, 6
      %v1600 = vsel %vm450, %v1598, %v1599
      %1601 = vrot.lane.b32.xlu0 %v1593, 127
      %v1602 = vpop.permute.xlu0 %1601
      %1603 = vrot.lane.b32.xlu0 %v1594, 127
      %v1604 = vpop.permute.xlu0 %1603
      %1605 = vrot.lane.b32.xlu0 %v1597, 127
      %v1606 = vpop.permute.xlu0 %1605
      %1607 = vrot.lane.b32.xlu0 %v1600, 127
      %v1608 = vpop.permute.xlu0 %1607
      %v1609 = vrot.slane %v1602, 4
      %v1610 = vrot.slane %v1604, 4
      %v1611 = vrot.slane %v1606, 4
      %v1612 = vrot.slane %v1608, 4
      %v1613 = vsel %vm645, %v1609, %v1610
      %v1614 = vsel %vm647, %v1602, %v1613
      %v1615 = vsel %vm645, %v1611, %v1612
      %v1616 = vsel %vm647, %v1606, %v1615
      %1621 = vst [vmem:[#allocation5 + $0x54] sm:$0xcc] %v1614
      %vm1622 = vcmask 846850
      %1623 = vst.msk [vmem:[#allocation5 + $0x5c] sm:$0xc] %vm1622, %v1604
      %1624 = vst [vmem:[#allocation5 + $0x60] sm:$0xff] %v1616
      %1625 = vst.msk [vmem:[#allocation5 + $0x68] sm:$0xf] %vm656, %v1608
      %v1626 = vld [vmem:[#allocation2] sm:$0xff]
      %v1627 = vld [vmem:[#allocation2 + $0x8] sm:$0xf]
      %v1628 = vld [vmem:[#allocation2 + $0xc] sm:$0x33]
      %v1629 = vld [vmem:[#allocation2 + $0x14] sm:$0x3]
      %1634 = vrot.lane.b32.xlu0 %v1626, 110
      %v1635 = vpop.permute.xlu0 %1634
      %1636 = vrot.lane.b32.xlu0 %v1627, 110
      %v1637 = vpop.permute.xlu0 %1636
      %1638 = vrot.lane.b32.xlu0 %v1628, 110
      %v1639 = vpop.permute.xlu0 %1638
      %1640 = vrot.lane.b32.xlu0 %v1629, 110
      %v1641 = vpop.permute.xlu0 %1640
      %v1642 = vrot.slane %v1635, 4
      %v1643 = vrot.slane %v1637, 4
      %v1644 = vrot.slane %v1639, 4
      %v1645 = vrot.slane %v1641, 4
      %v1646 = vsel %vm645, %v1642, %v1643
      %v1647 = vsel %vm725, %v1635, %v1646
      %v1648 = vsel %vm645, %v1644, %v1645
      %v1649 = vsel %vm725, %v1639, %v1648
      %1654 = vst [vmem:[#allocation5 + $0x6c] sm:$0xff] %v1647
      %1655 = vst.msk [vmem:[#allocation5 + $0x74] sm:$0xf] %vm734, %v1637
      %1656 = vst [vmem:[#allocation5 + $0x78] sm:$0x33] %v1649
      %1657 = vst.msk [vmem:[#allocation5 + $0x80] sm:$0x3] %vm737, %v1641
      %v1658 = vld [vmem:[#allocation2] sm:$0xff]
      %v1659 = vld [vmem:[#allocation2 + $0x8] sm:$0xf]
      %v1660 = vld [vmem:[#allocation2 + $0xc] sm:$0x33]
      %v1661 = vld [vmem:[#allocation2 + $0x14] sm:$0x3]
      %v1666 = vrot.slane %v1658, 6
      %v1667 = vrot.slane %v1659, 6
      %v1668 = vrot.slane %v1666, 4
      %v1669 = vrot.slane %v1660, 6
      %v1670 = vsel %vm450, %v1668, %v1669
      %v1671 = vrot.slane %v1667, 4
      %v1672 = vrot.slane %v1661, 6
      %v1673 = vsel %vm450, %v1671, %v1672
      %1674 = vrot.lane.b32.xlu0 %v1666, 109
      %v1675 = vpop.permute.xlu0 %1674
      %1676 = vrot.lane.b32.xlu0 %v1667, 109
      %v1677 = vpop.permute.xlu0 %1676
      %1678 = vrot.lane.b32.xlu0 %v1670, 109
      %v1679 = vpop.permute.xlu0 %1678
      %1680 = vrot.lane.b32.xlu0 %v1673, 109
      %v1681 = vpop.permute.xlu0 %1680
      %v1682 = vrot.slane %v1675, 4
      %v1683 = vrot.slane %v1677, 4
      %v1684 = vrot.slane %v1679, 4
      %v1685 = vrot.slane %v1681, 4
      %v1686 = vsel %vm645, %v1682, %v1683
      %v1687 = vsel %vm768, %v1675, %v1686
      %v1688 = vsel %vm645, %v1684, %v1685
      %v1689 = vsel %vm768, %v1679, %v1688
      %1694 = vst [vmem:[#allocation5 + $0x78] sm:$0xcc] %v1687
      %1695 = vst.msk [vmem:[#allocation5 + $0x80] sm:$0xc] %vm777, %v1677
      %1696 = vst [vmem:[#allocation5 + $0x84] sm:$0xff] %v1689
      %1697 = vst.msk [vmem:[#allocation5 + $0x8c] sm:$0xf] %vm780, %v1681
      %v1698 = vld [vmem:[#allocation2] sm:$0xff]
      %v1699 = vld [vmem:[#allocation2 + $0x8] sm:$0xf]
      %v1700 = vld [vmem:[#allocation2 + $0xc] sm:$0x33]
      %v1701 = vld [vmem:[#allocation2 + $0x14] sm:$0x3]
      %1706 = vrot.lane.b32.xlu0 %v1698, 108
      %v1707 = vpop.permute.xlu0 %1706
      %1708 = vrot.lane.b32.xlu0 %v1699, 108
      %v1709 = vpop.permute.xlu0 %1708
      %1710 = vrot.lane.b32.xlu0 %v1700, 108
      %v1711 = vpop.permute.xlu0 %1710
      %1712 = vrot.lane.b32.xlu0 %v1701, 108
      %v1713 = vpop.permute.xlu0 %1712
      %v1714 = vrot.slane %v1707, 4
      %v1715 = vrot.slane %v1709, 4
      %v1716 = vrot.slane %v1711, 4
      %v1717 = vrot.slane %v1713, 4
      %v1718 = vsel %vm645, %v1714, %v1715
      %v1719 = vsel %vm803, %v1707, %v1718
      %v1720 = vsel %vm645, %v1716, %v1717
      %v1721 = vsel %vm803, %v1711, %v1720
      %1726 = vst [vmem:[#allocation5 + $0x90] sm:$0xff] %v1719
      %1727 = vst.msk [vmem:[#allocation5 + $0x98] sm:$0xf] %vm812, %v1709
      %1728 = vst [vmem:[#allocation5 + $0x9c] sm:$0x33] %v1721
      %1729 = vst.msk [vmem:[#allocation5 + $0xa4] sm:$0x3] %vm815, %v1713
      %v1730 = vld [vmem:[%s6] sm:$0x3]
      %v1731 = vld [vmem:[#allocation5] sm:$0xff]
      %v1732 = vld [vmem:[#allocation5 + $0x8] sm:$0xf]
      %v1733 = vld [vmem:[#allocation5 + $0xc] sm:$0xff]
      %v1734 = vld [vmem:[#allocation5 + $0x14] sm:$0xf]
      %v1735 = vld [vmem:[#allocation5 + $0x18] sm:$0xff]
      %v1736 = vld [vmem:[#allocation5 + $0x20] sm:$0xf]
      %v1737 = vld [vmem:[#allocation5 + $0x24] sm:$0xff]
      %v1738 = vld [vmem:[#allocation5 + $0x2c] sm:$0xf]
      %v1739 = vld [vmem:[#allocation5 + $0x30] sm:$0xff]
      %v1740 = vld [vmem:[#allocation5 + $0x38] sm:$0xf]
      %v1741 = vld [vmem:[#allocation5 + $0x3c] sm:$0xff]
      %v1742 = vld [vmem:[#allocation5 + $0x44] sm:$0xf]
      %v1743 = vld [vmem:[#allocation5 + $0x48] sm:$0xff]
      %v1744 = vld [vmem:[#allocation5 + $0x50] sm:$0xf]
      %v1745 = vld [vmem:[#allocation5 + $0x54] sm:$0xff]
      %v1746 = vld [vmem:[#allocation5 + $0x5c] sm:$0xf]
      %v1747 = vld [vmem:[#allocation5 + $0x60] sm:$0xff]
      %v1748 = vld [vmem:[#allocation5 + $0x68] sm:$0xf]
      %v1749 = vld [vmem:[#allocation5 + $0x6c] sm:$0xff]
      %v1750 = vld [vmem:[#allocation5 + $0x74] sm:$0xf]
      %v1751 = vld [vmem:[#allocation5 + $0x78] sm:$0xff]
      %v1752 = vld [vmem:[#allocation5 + $0x80] sm:$0xf]
      %v1753 = vld [vmem:[#allocation5 + $0x84] sm:$0xff]
      %v1754 = vld [vmem:[#allocation5 + $0x8c] sm:$0xf]
      %v1755 = vld [vmem:[#allocation5 + $0x90] sm:$0xff]
      %v1756 = vld [vmem:[#allocation5 + $0x98] sm:$0xf]
      %v1757 = vld [vmem:[#allocation5 + $0x9c] sm:$0x33]
      %v1758 = vld [vmem:[#allocation5 + $0xa4] sm:$0x3]
      %v1759 = vld [vmem:[%s7] sm:$0xf]
      %1761 = vset.pattern.permute.xlu0 0
      %1762 = vperm.xlu0 %1761, %v1759
      %v1763 = vpop.permute.xlu0 %1762
      %v1793 = vunpack.c.l.b16 %v1731
      %v1794 = vunpack.c.h.b16 %v1731
      %v1795 = vunpack.c.l.b16 %v1732
      %v1796 = vunpack.c.l.b16 %v1733
      %v1797 = vunpack.c.h.b16 %v1733
      %v1798 = vunpack.c.l.b16 %v1734
      %v1799 = vunpack.c.l.b16 %v1735
      %v1800 = vunpack.c.h.b16 %v1735
      %v1801 = vunpack.c.l.b16 %v1736
      %v1802 = vunpack.c.l.b16 %v1737
      %v1803 = vunpack.c.h.b16 %v1737
      %v1804 = vunpack.c.l.b16 %v1738
      %v1805 = vunpack.c.l.b16 %v1739
      %v1806 = vunpack.c.h.b16 %v1739
      %v1807 = vunpack.c.l.b16 %v1740
      %v1808 = vunpack.c.l.b16 %v1741
      %v1809 = vunpack.c.h.b16 %v1741
      %v1810 = vunpack.c.l.b16 %v1742
      %v1811 = vunpack.c.l.b16 %v1743
      %v1812 = vunpack.c.h.b16 %v1743
      %v1813 = vunpack.c.l.b16 %v1744
      %v1814 = vunpack.c.l.b16 %v1745
      %v1815 = vunpack.c.h.b16 %v1745
      %v1816 = vunpack.c.l.b16 %v1746
      %v1817 = vunpack.c.l.b16 %v1747
      %v1818 = vunpack.c.h.b16 %v1747
      %v1819 = vunpack.c.l.b16 %v1748
      %v1820 = vunpack.c.l.b16 %v1749
      %v1821 = vunpack.c.h.b16 %v1749
      %v1822 = vunpack.c.l.b16 %v1750
      %v1823 = vunpack.c.l.b16 %v1751
      %v1824 = vunpack.c.h.b16 %v1751
      %v1825 = vunpack.c.l.b16 %v1752
      %v1826 = vunpack.c.l.b16 %v1753
      %v1827 = vunpack.c.h.b16 %v1753
      %v1828 = vunpack.c.l.b16 %v1754
      %v1829 = vunpack.c.l.b16 %v1755
      %v1830 = vunpack.c.h.b16 %v1755
      %v1831 = vunpack.c.l.b16 %v1756
      %v1832 = vunpack.c.l.b16 %v1757
      %v1833 = vunpack.c.h.b16 %v1757
      %v1834 = vunpack.c.l.b16 %v1758
      %v1835 = vpack.c.b16 %v1796, %v1793
      %v1836 = vpack.c.b16 %v1797, %v1794
      %v1837 = vpack.c.b16 %v1798, %v1795
      %v1838 = vpack.c.b16 %v1802, %v1799
      %v1839 = vpack.c.b16 %v1803, %v1800
      %v1840 = vpack.c.b16 %v1804, %v1801
      %v1841 = vpack.c.b16 %v1808, %v1805
      %v1842 = vpack.c.b16 %v1809, %v1806
      %v1843 = vpack.c.b16 %v1810, %v1807
      %v1844 = vpack.c.b16 %v1814, %v1811
      %v1845 = vpack.c.b16 %v1815, %v1812
      %v1846 = vpack.c.b16 %v1816, %v1813
      %v1847 = vpack.c.b16 %v1820, %v1817
      %v1848 = vpack.c.b16 %v1821, %v1818
      %v1849 = vpack.c.b16 %v1822, %v1819
      %v1850 = vpack.c.b16 %v1826, %v1823
      %v1851 = vpack.c.b16 %v1827, %v1824
      %v1852 = vpack.c.b16 %v1828, %v1825
      %v1853 = vpack.c.b16 %v1832, %v1829
      %v1854 = vpack.c.b16 %v1833, %v1830
      %v1855 = vpack.c.b16 %v1834, %v1831
      %vm1874 = vcmask 883712
      %v1876 = vsel %vm1874, %v1730, 0
      %vm1878 = vcmask 1045504
      %v1880 = vsel %vm1878, %v1853, 0
      %v1883 = vsel %vm1878, %v1854, 0
      %v1886 = vsel %vm1878, %v1855, 0
      %1888 = vmatprep.subr.bf16.mxu0 0
      %1889 = vmatpush1.bf16.msra.mxu0 0
      %1890 = vmatprep.subr.bf16.mxu0 %v1883
      %1891 = vmatpush1.bf16.msra.mxu0 %v1880
      %1892 = vmatprep.subr.bf16.mxu0 %v1851
      %1893 = vmatpush1.bf16.msra.mxu0 %v1850
      %1894 = vmatprep.subr.bf16.mxu0 %v1848
      %1895 = vmatpush1.bf16.msra.mxu0 %v1847
      %1896 = vmatprep.subr.bf16.mxu0 %v1845
      %1897 = vmatpush1.bf16.msra.mxu0 %v1844
      %1898 = vmatprep.subr.bf16.mxu0 %v1842
      %1899 = vmatpush1.bf16.msra.mxu0 %v1841
      %1900 = vmatprep.subr.bf16.mxu0 %v1839
      %1901 = vmatpush1.bf16.msra.mxu0 %v1838
      %1902 = vmatprep.subr.bf16.mxu0 %v1836
      %1903 = vmatpush1.bf16.msra.mxu0 %v1835
      %1904 = vmatprep.subr.bf16.mxu0 0
      %1905 = vmatpush2.bf16.msra.mxu0 0
      %1906 = vmatprep.subr.bf16.mxu0 0
      %1907 = vmatpush2.bf16.msra.mxu0 0
      %1908 = vmatprep.subr.bf16.mxu0 0
      %1909 = vmatpush2.bf16.msra.mxu0 0
      %1910 = vmatprep.subr.bf16.mxu0 0
      %1911 = vmatpush2.bf16.msra.mxu0 0
      %1912 = vmatprep.subr.bf16.mxu0 0
      %1913 = vmatpush2.bf16.msra.mxu0 0
      %1914 = vmatprep.subr.bf16.mxu0 0
      %1915 = vmatpush2.bf16.msra.mxu0 0
      %1916 = vmatprep.subr.bf16.mxu0 0
      %1917 = vmatpush2.bf16.msra.mxu0 0
      %1918 = vmatprep.subr.bf16.mxu0 0
      %1919 = vmatpush2.bf16.msra.mxu0 0
      %1920 = vmatprep.mubr.bf16.mxu0 0
      %1921 = vmatmul.mubr.bf16.gmra.mxu0 %v1876
      %v1922 = vpop.f32.mrf.mxu0
      %v1923 = vadd.f32 %v1763, %v1922
      %v1924 = vpop.f32.mrf.mxu0
      %v1925 = vadd.f32 %v1763, %v1924
      %v1926 = vpop.f32.mrf.mxu0
      %v1927 = vpop.f32.mrf.mxu0
      %1928 = vdwg.mxu0
      %1929 = vmatprep.subr.bf16.mxu0 0
      %1930 = vmatpush1.bf16.msra.mxu0 0
      %1931 = vmatprep.subr.bf16.mxu0 0
      %1932 = vmatpush1.bf16.msra.mxu0 %v1886
      %1933 = vmatprep.subr.bf16.mxu0 0
      %1934 = vmatpush1.bf16.msra.mxu0 %v1852
      %1935 = vmatprep.subr.bf16.mxu0 0
      %1936 = vmatpush1.bf16.msra.mxu0 %v1849
      %1937 = vmatprep.subr.bf16.mxu0 0
      %1938 = vmatpush1.bf16.msra.mxu0 %v1846
      %1939 = vmatprep.subr.bf16.mxu0 0
      %1940 = vmatpush1.bf16.msra.mxu0 %v1843
      %1941 = vmatprep.subr.bf16.mxu0 0
      %1942 = vmatpush1.bf16.msra.mxu0 %v1840
      %1943 = vmatprep.subr.bf16.mxu0 0
      %1944 = vmatpush1.bf16.msra.mxu0 %v1837
      %1945 = vmatprep.subr.bf16.mxu0 0
      %1946 = vmatpush2.bf16.msra.mxu0 0
      %1947 = vmatprep.subr.bf16.mxu0 0
      %1948 = vmatpush2.bf16.msra.mxu0 0
      %1949 = vmatprep.subr.bf16.mxu0 0
      %1950 = vmatpush2.bf16.msra.mxu0 0
      %1951 = vmatprep.subr.bf16.mxu0 0
      %1952 = vmatpush2.bf16.msra.mxu0 0
      %1953 = vmatprep.subr.bf16.mxu0 0
      %1954 = vmatpush2.bf16.msra.mxu0 0
      %1955 = vmatprep.subr.bf16.mxu0 0
      %1956 = vmatpush2.bf16.msra.mxu0 0
      %1957 = vmatprep.subr.bf16.mxu0 0
      %1958 = vmatpush2.bf16.msra.mxu0 0
      %1959 = vmatprep.subr.bf16.mxu0 0
      %1960 = vmatpush2.bf16.msra.mxu0 0
      %1961 = vmatprep.mubr.bf16.mxu0 0
      %1962 = vmatmul.mubr.bf16.gmra.mxu0 %v1876
      %v1963 = vpop.f32.mrf.mxu0
      %v1964 = vadd.f32 %v1763, %v1963
      %v1965 = vpop.f32.mrf.mxu0
      %v1966 = vpop.f32.mrf.mxu0
      %v1967 = vpop.f32.mrf.mxu0
      %1968 = vdwg.mxu0
      %v1969 = vmax.f32 %v1923, 0.0
      %v1970 = vmax.f32 %v1925, 0.0
      %v1971 = vmax.f32 %v1964, 0.0
      %v1972 = vsel %vm1374, %v1969, 0.0
      %v1973 = vsel %vm1375, %v1970, 0.0
      %v1974 = vsel %vm1376, %v1971, 0.0
      %v1975 = vpack.c.bf16 %v1972, %v1972
      %v1976 = vpack.c.bf16 %v1973, %v1973
      %v1977 = vpack.c.bf16 %v1974, %v1974
      %v1981 = vcombine.low %v1975, %v1976
      %v1983 = vunpack.c.l.s4 1983009808
      %v1984 = vunpack.c.0.s8 %v1983
      %v1985 = vlaneseq
      %v1986 = vshrl.u32 %v1985, 7
      %v1987 = vsub.s32 %v1984, %v1986
      %v1988 = vrot.slane %v1981, %v1987
      %v1990 = vunpack.c.l.s4 1983009808
      %v1991 = vunpack.c.0.s8 %v1990
      %v1992 = vlaneseq
      %v1993 = vshrl.u32 %v1992, 7
      %v1994 = vsub.s32 %v1991, %v1993
      %v1995 = vrot.slane %v1977, %v1994
      %v1996 = vcombine.low %v1988, %v1995
      %vm1998 = vcmask 1041408
      %vm1999 = vcmask 1043458
      %vm2000 = vmor %vm1999, %vm1998
      %vm2001 = vcmask 857092
      %vm2002 = vmor %vm2001, %vm2000
      %2003 = vst.msk [vmem:[#allocation3] sm:$0x3f] %vm2002, %v1996
      %v2004 = vld [vmem:[#allocation3] sm:$0x3f]
      %v2006 = vcombine.high %v2004, %v2004
      %v2008 = vunpack.c.l.s4 1983009808
      %v2009 = vunpack.c.0.s8 %v2008
      %v2010 = vlaneseq
      %v2011 = vshrl.u32 %v2010, 7
      %v2012 = vsub.s32 %v2009, %v2011
      %v2013 = vrot.slane %v2004, %v2012
      %v2015 = vunpack.c.l.s4 1983009808
      %v2016 = vunpack.c.0.s8 %v2015
      %v2017 = vlaneseq
      %v2018 = vshrl.u32 %v2017, 7
      %v2019 = vsub.s32 %v2016, %v2018
      %v2020 = vrot.slane %v2006, %v2019
      %2021 = vrot.lane.b32.xlu0 %v2013, 20
      %v2022 = vpop.permute.xlu0 %2021
      %2023 = vrot.lane.b32.xlu0 %v2020, 20
      %v2024 = vpop.permute.xlu0 %2023
      %v2025 = vrot.slane %v2022, 4
      %v2026 = vsel %vm419, %v2025, %v2022
      %v2027 = vsel %vm419, %v2025, %v2024
      %2030 = vst.msk [vmem:[#allocation6] sm:$0x33] %vm436, %v2026
      %2031 = vst.msk [vmem:[#allocation6 + $0x8] sm:$0x3] %vm438, %v2027
      %v2032 = vld [vmem:[#allocation3] sm:$0x3f]
      %v2034 = vcombine.low %v2032, %v2032
      %v2036 = vunpack.c.l.s4 1983009808
      %v2037 = vunpack.c.0.s8 %v2036
      %v2038 = vlaneseq
      %v2039 = vshrl.u32 %v2038, 7
      %v2040 = vsub.s32 %v2037, %v2039
      %v2041 = vrot.slane %v2034, %v2040
      %v2043 = vunpack.c.l.s4 1983009808
      %v2044 = vunpack.c.0.s8 %v2043
      %v2045 = vlaneseq
      %v2046 = vshrl.u32 %v2045, 7
      %v2047 = vsub.s32 %v2044, %v2046
      %v2048 = vrot.slane %v2032, %v2047
      %2049 = vrot.lane.b32.xlu0 %v2041, 19
      %v2050 = vpop.permute.xlu0 %2049
      %2051 = vrot.lane.b32.xlu0 %v2048, 19
      %v2052 = vpop.permute.xlu0 %2051
      %v2053 = vrot.slane %v2050, 4
      %v2054 = vsel %vm469, %v2053, %v2050
      %v2055 = vsel %vm469, %v2053, %v2052
      %2058 = vst.msk [vmem:[#allocation6] sm:$0xcc] %vm480, %v2054
      %2059 = vst.msk [vmem:[#allocation6 + $0x8] sm:$0xc] %vm482, %v2055
      %v2060 = vld [vmem:[#allocation3] sm:$0x3f]
      %v2062 = vcombine.high %v2060, %v2060
      %v2064 = vunpack.c.l.s4 1983009808
      %v2065 = vunpack.c.0.s8 %v2064
      %v2066 = vlaneseq
      %v2067 = vshrl.u32 %v2066, 7
      %v2068 = vsub.s32 %v2065, %v2067
      %v2069 = vrot.slane %v2060, %v2068
      %v2071 = vunpack.c.l.s4 1983009808
      %v2072 = vunpack.c.0.s8 %v2071
      %v2073 = vlaneseq
      %v2074 = vshrl.u32 %v2073, 7
      %v2075 = vsub.s32 %v2072, %v2074
      %v2076 = vrot.slane %v2062, %v2075
      %2077 = vrot.lane.b32.xlu0 %v2069, 18
      %v2078 = vpop.permute.xlu0 %2077
      %2079 = vrot.lane.b32.xlu0 %v2076, 18
      %v2080 = vpop.permute.xlu0 %2079
      %v2081 = vrot.slane %v2078, 4
      %v2082 = vsel %vm506, %v2081, %v2078
      %v2083 = vsel %vm506, %v2081, %v2080
      %2086 = vst.msk [vmem:[#allocation6 + $0xc] sm:$0x33] %vm520, %v2082
      %2087 = vst.msk [vmem:[#allocation6 + $0x14] sm:$0x3] %vm438, %v2083
      %v2088 = vld [vmem:[#allocation3] sm:$0x3f]
      %v2090 = vcombine.low %v2088, %v2088
      %v2092 = vunpack.c.l.s4 1983009808
      %v2093 = vunpack.c.0.s8 %v2092
      %v2094 = vlaneseq
      %v2095 = vshrl.u32 %v2094, 7
      %v2096 = vsub.s32 %v2093, %v2095
      %v2097 = vrot.slane %v2090, %v2096
      %v2099 = vunpack.c.l.s4 1983009808
      %v2100 = vunpack.c.0.s8 %v2099
      %v2101 = vlaneseq
      %v2102 = vshrl.u32 %v2101, 7
      %v2103 = vsub.s32 %v2100, %v2102
      %v2104 = vrot.slane %v2088, %v2103
      %2105 = vrot.lane.b32.xlu0 %v2097, 1
      %v2106 = vpop.permute.xlu0 %2105
      %2107 = vrot.lane.b32.xlu0 %v2104, 1
      %v2108 = vpop.permute.xlu0 %2107
      %v2109 = vrot.slane %v2106, 4
      %v2110 = vsel %vm584, %v2109, %v2106
      %v2111 = vsel %vm584, %v2109, %v2108
      %2114 = vst.msk [vmem:[#allocation6 + $0xc] sm:$0xcc] %vm1572, %v2110
      %2115 = vst.msk [vmem:[#allocation6 + $0x14] sm:$0xc] %vm482, %v2111
      %v2116 = vld [vmem:[#allocation3] sm:$0x3f]
      %v2118 = vcombine.high %v2116, %v2116
      %v2120 = vunpack.c.l.s4 1983009808
      %v2121 = vunpack.c.0.s8 %v2120
      %v2122 = vlaneseq
      %v2123 = vshrl.u32 %v2122, 7
      %v2124 = vsub.s32 %v2121, %v2123
      %v2125 = vrot.slane %v2116, %v2124
      %v2127 = vunpack.c.l.s4 1983009808
      %v2128 = vunpack.c.0.s8 %v2127
      %v2129 = vlaneseq
      %v2130 = vshrl.u32 %v2129, 7
      %v2131 = vsub.s32 %v2128, %v2130
      %v2132 = vrot.slane %v2118, %v2131
      %2135 = vst [vmem:[#allocation6 + $0x18] sm:$0x33] %v2125
      %2136 = vst.msk [vmem:[#allocation6 + $0x20] sm:$0x3] %vm438, %v2132
      %v2137 = vld [vmem:[#allocation3] sm:$0x3f]
      %v2139 = vcombine.low %v2137, %v2137
      %v2141 = vunpack.c.l.s4 1983009808
      %v2142 = vunpack.c.0.s8 %v2141
      %v2143 = vlaneseq
      %v2144 = vshrl.u32 %v2143, 7
      %v2145 = vsub.s32 %v2142, %v2144
      %v2146 = vrot.slane %v2139, %v2145
      %v2148 = vunpack.c.l.s4 1983009808
      %v2149 = vunpack.c.0.s8 %v2148
      %v2150 = vlaneseq
      %v2151 = vshrl.u32 %v2150, 7
      %v2152 = vsub.s32 %v2149, %v2151
      %v2153 = vrot.slane %v2137, %v2152
      %2154 = vrot.lane.b32.xlu0 %v2146, 127
      %v2155 = vpop.permute.xlu0 %2154
      %2156 = vrot.lane.b32.xlu0 %v2153, 127
      %v2157 = vpop.permute.xlu0 %2156
      %v2158 = vrot.slane %v2155, 4
      %v2159 = vrot.slane %v2157, 4
      %v2160 = vsel %vm645, %v2158, %v2159
      %v2161 = vsel %vm647, %v2155, %v2160
      %2164 = vst [vmem:[#allocation6 + $0x18] sm:$0xcc] %v2161
      %2165 = vst.msk [vmem:[#allocation6 + $0x20] sm:$0xc] %vm1622, %v2157
      %v2166 = vld [vmem:[#allocation3] sm:$0x3f]
      %v2168 = vcombine.high %v2166, %v2166
      %v2170 = vunpack.c.l.s4 1983009808
      %v2171 = vunpack.c.0.s8 %v2170
      %v2172 = vlaneseq
      %v2173 = vshrl.u32 %v2172, 7
      %v2174 = vsub.s32 %v2171, %v2173
      %v2175 = vrot.slane %v2166, %v2174
      %v2177 = vunpack.c.l.s4 1983009808
      %v2178 = vunpack.c.0.s8 %v2177
      %v2179 = vlaneseq
      %v2180 = vshrl.u32 %v2179, 7
      %v2181 = vsub.s32 %v2178, %v2180
      %v2182 = vrot.slane %v2168, %v2181
      %2183 = vrot.lane.b32.xlu0 %v2175, 110
      %v2184 = vpop.permute.xlu0 %2183
      %2185 = vrot.lane.b32.xlu0 %v2182, 110
      %v2186 = vpop.permute.xlu0 %2185
      %v2187 = vrot.slane %v2184, 4
      %v2188 = vrot.slane %v2186, 4
      %v2189 = vsel %vm645, %v2187, %v2188
      %v2190 = vsel %vm725, %v2184, %v2189
      %2193 = vst [vmem:[#allocation6 + $0x24] sm:$0x33] %v2190
      %2194 = vst.msk [vmem:[#allocation6 + $0x2c] sm:$0x3] %vm737, %v2186
      %v2195 = vld [vmem:[#allocation3] sm:$0x3f]
      %v2197 = vcombine.low %v2195, %v2195
      %v2199 = vunpack.c.l.s4 1983009808
      %v2200 = vunpack.c.0.s8 %v2199
      %v2201 = vlaneseq
      %v2202 = vshrl.u32 %v2201, 7
      %v2203 = vsub.s32 %v2200, %v2202
      %v2204 = vrot.slane %v2197, %v2203
      %v2206 = vunpack.c.l.s4 1983009808
      %v2207 = vunpack.c.0.s8 %v2206
      %v2208 = vlaneseq
      %v2209 = vshrl.u32 %v2208, 7
      %v2210 = vsub.s32 %v2207, %v2209
      %v2211 = vrot.slane %v2195, %v2210
      %2212 = vrot.lane.b32.xlu0 %v2204, 109
      %v2213 = vpop.permute.xlu0 %2212
      %2214 = vrot.lane.b32.xlu0 %v2211, 109
      %v2215 = vpop.permute.xlu0 %2214
      %v2216 = vrot.slane %v2213, 4
      %v2217 = vrot.slane %v2215, 4
      %v2218 = vsel %vm645, %v2216, %v2217
      %v2219 = vsel %vm768, %v2213, %v2218
      %2222 = vst [vmem:[#allocation6 + $0x24] sm:$0xcc] %v2219
      %2223 = vst.msk [vmem:[#allocation6 + $0x2c] sm:$0xc] %vm777, %v2215
      %v2224 = vld [vmem:[#allocation3] sm:$0x3f]
      %v2226 = vcombine.high %v2224, %v2224
      %v2228 = vunpack.c.l.s4 1983009808
      %v2229 = vunpack.c.0.s8 %v2228
      %v2230 = vlaneseq
      %v2231 = vshrl.u32 %v2230, 7
      %v2232 = vsub.s32 %v2229, %v2231
      %v2233 = vrot.slane %v2224, %v2232
      %v2235 = vunpack.c.l.s4 1983009808
      %v2236 = vunpack.c.0.s8 %v2235
      %v2237 = vlaneseq
      %v2238 = vshrl.u32 %v2237, 7
      %v2239 = vsub.s32 %v2236, %v2238
      %v2240 = vrot.slane %v2226, %v2239
      %2241 = vrot.lane.b32.xlu0 %v2233, 108
      %v2242 = vpop.permute.xlu0 %2241
      %2243 = vrot.lane.b32.xlu0 %v2240, 108
      %v2244 = vpop.permute.xlu0 %2243
      %v2245 = vrot.slane %v2242, 4
      %v2246 = vrot.slane %v2244, 4
      %v2247 = vsel %vm645, %v2245, %v2246
      %v2248 = vsel %vm803, %v2242, %v2247
      %2251 = vst [vmem:[#allocation6 + $0x30] sm:$0x33] %v2248
      %2252 = vst.msk [vmem:[#allocation6 + $0x38] sm:$0x3] %vm815, %v2244
      %v2253 = vld [vmem:[%s8] sm:$0x3]
      %v2254 = vld [vmem:[#allocation6] sm:$0xff]
      %v2255 = vld [vmem:[#allocation6 + $0x8] sm:$0xf]
      %v2256 = vld [vmem:[#allocation6 + $0xc] sm:$0xff]
      %v2257 = vld [vmem:[#allocation6 + $0x14] sm:$0xf]
      %v2258 = vld [vmem:[#allocation6 + $0x18] sm:$0xff]
      %v2259 = vld [vmem:[#allocation6 + $0x20] sm:$0xf]
      %v2260 = vld [vmem:[#allocation6 + $0x24] sm:$0xff]
      %v2261 = vld [vmem:[#allocation6 + $0x2c] sm:$0xf]
      %v2262 = vld [vmem:[#allocation6 + $0x30] sm:$0x33]
      %v2263 = vld [vmem:[#allocation6 + $0x38] sm:$0x3]
      %v2264 = vld [vmem:[%s9] sm:$0xf]
      %2266 = vset.pattern.permute.xlu0 0
      %2267 = vperm.xlu0 %2266, %v2264
      %v2268 = vpop.permute.xlu0 %2267
      %v2280 = vunpack.c.l.b16 %v2254
      %v2281 = vunpack.c.h.b16 %v2254
      %v2282 = vunpack.c.l.b16 %v2255
      %v2283 = vunpack.c.l.b16 %v2256
      %v2284 = vunpack.c.h.b16 %v2256
      %v2285 = vunpack.c.l.b16 %v2257
      %v2286 = vunpack.c.l.b16 %v2258
      %v2287 = vunpack.c.h.b16 %v2258
      %v2288 = vunpack.c.l.b16 %v2259
      %v2289 = vunpack.c.l.b16 %v2260
      %v2290 = vunpack.c.h.b16 %v2260
      %v2291 = vunpack.c.l.b16 %v2261
      %v2292 = vunpack.c.l.b16 %v2262
      %v2293 = vunpack.c.h.b16 %v2262
      %v2294 = vunpack.c.l.b16 %v2263
      %v2295 = vpack.c.b16 %v2283, %v2280
      %v2296 = vpack.c.b16 %v2284, %v2281
      %v2297 = vpack.c.b16 %v2285, %v2282
      %v2298 = vpack.c.b16 %v2289, %v2286
      %v2299 = vpack.c.b16 %v2290, %v2287
      %v2300 = vpack.c.b16 %v2291, %v2288
      %v2301 = vpack.c.b16 %v2292, %v2292
      %v2302 = vpack.c.b16 %v2293, %v2293
      %v2303 = vpack.c.b16 %v2294, %v2294
      %vm2310 = vcmask 293888
      %v2312 = vsel %vm2310, %v2253, 0
      %v2315 = vsel %vm1998, %v2301, 0
      %v2318 = vsel %vm1998, %v2302, 0
      %v2321 = vsel %vm1998, %v2303, 0
      %2323 = vmatprep.subr.bf16.mxu0 0
      %2324 = vmatpush1.bf16.msra.mxu0 0
      %2325 = vmatprep.subr.bf16.mxu0 0
      %2326 = vmatpush1.bf16.msra.mxu0 0
      %2327 = vmatprep.subr.bf16.mxu0 0
      %2328 = vmatpush1.bf16.msra.mxu0 0
      %2329 = vmatprep.subr.bf16.mxu0 0
      %2330 = vmatpush1.bf16.msra.mxu0 0
      %2331 = vmatprep.subr.bf16.mxu0 0
      %2332 = vmatpush1.bf16.msra.mxu0 0
      %2333 = vmatprep.subr.bf16.mxu0 %v2318
      %2334 = vmatpush1.bf16.msra.mxu0 %v2315
      %2335 = vmatprep.subr.bf16.mxu0 %v2299
      %2336 = vmatpush1.bf16.msra.mxu0 %v2298
      %2337 = vmatprep.subr.bf16.mxu0 %v2296
      %2338 = vmatpush1.bf16.msra.mxu0 %v2295
      %2339 = vmatprep.subr.bf16.mxu0 0
      %2340 = vmatpush2.bf16.msra.mxu0 0
      %2341 = vmatprep.subr.bf16.mxu0 0
      %2342 = vmatpush2.bf16.msra.mxu0 0
      %2343 = vmatprep.subr.bf16.mxu0 0
      %2344 = vmatpush2.bf16.msra.mxu0 0
      %2345 = vmatprep.subr.bf16.mxu0 0
      %2346 = vmatpush2.bf16.msra.mxu0 0
      %2347 = vmatprep.subr.bf16.mxu0 0
      %2348 = vmatpush2.bf16.msra.mxu0 0
      %2349 = vmatprep.subr.bf16.mxu0 0
      %2350 = vmatpush2.bf16.msra.mxu0 0
      %2351 = vmatprep.subr.bf16.mxu0 0
      %2352 = vmatpush2.bf16.msra.mxu0 0
      %2353 = vmatprep.subr.bf16.mxu0 0
      %2354 = vmatpush2.bf16.msra.mxu0 0
      %2355 = vmatprep.mubr.bf16.mxu0 0
      %2356 = vmatmul.mubr.bf16.gmra.mxu0 %v2312
      %v2357 = vpop.f32.mrf.mxu0
      %v2358 = vadd.f32 %v2268, %v2357
      %v2359 = vpop.f32.mrf.mxu0
      %v2360 = vadd.f32 %v2268, %v2359
      %v2361 = vpop.f32.mrf.mxu0
      %v2362 = vpop.f32.mrf.mxu0
      %2363 = vdwg.mxu0
      %2364 = vmatprep.subr.bf16.mxu0 0
      %2365 = vmatpush1.bf16.msra.mxu0 0
      %2366 = vmatprep.subr.bf16.mxu0 0
      %2367 = vmatpush1.bf16.msra.mxu0 0
      %2368 = vmatprep.subr.bf16.mxu0 0
      %2369 = vmatpush1.bf16.msra.mxu0 0
      %2370 = vmatprep.subr.bf16.mxu0 0
      %2371 = vmatpush1.bf16.msra.mxu0 0
      %2372 = vmatprep.subr.bf16.mxu0 0
      %2373 = vmatpush1.bf16.msra.mxu0 0
      %2374 = vmatprep.subr.bf16.mxu0 0
      %2375 = vmatpush1.bf16.msra.mxu0 %v2321
      %2376 = vmatprep.subr.bf16.mxu0 0
      %2377 = vmatpush1.bf16.msra.mxu0 %v2300
      %2378 = vmatprep.subr.bf16.mxu0 0
      %2379 = vmatpush1.bf16.msra.mxu0 %v2297
      %2380 = vmatprep.subr.bf16.mxu0 0
      %2381 = vmatpush2.bf16.msra.mxu0 0
      %2382 = vmatprep.subr.bf16.mxu0 0
      %2383 = vmatpush2.bf16.msra.mxu0 0
      %2384 = vmatprep.subr.bf16.mxu0 0
      %2385 = vmatpush2.bf16.msra.mxu0 0
      %2386 = vmatprep.subr.bf16.mxu0 0
      %2387 = vmatpush2.bf16.msra.mxu0 0
      %2388 = vmatprep.subr.bf16.mxu0 0
      %2389 = vmatpush2.bf16.msra.mxu0 0
      %2390 = vmatprep.subr.bf16.mxu0 0
      %2391 = vmatpush2.bf16.msra.mxu0 0
      %2392 = vmatprep.subr.bf16.mxu0 0
      %2393 = vmatpush2.bf16.msra.mxu0 0
      %2394 = vmatprep.subr.bf16.mxu0 0
      %2395 = vmatpush2.bf16.msra.mxu0 0
      %2396 = vmatprep.mubr.bf16.mxu0 0
      %2397 = vmatmul.mubr.bf16.gmra.mxu0 %v2312
      %v2398 = vpop.f32.mrf.mxu0
      %v2399 = vadd.f32 %v2268, %v2398
      %v2400 = vpop.f32.mrf.mxu0
      %v2401 = vpop.f32.mrf.mxu0
      %v2402 = vpop.f32.mrf.mxu0
      %2403 = vdwg.mxu0
      %v2404 = vmax.f32 %v2358, 0.0
      %v2405 = vmax.f32 %v2360, 0.0
      %v2406 = vmax.f32 %v2399, 0.0
      %2408 = vrot.lane.b32.xlu0 %v2404, 108
      %v2409 = vpop.permute.xlu0 %2408
      %vm2411 = vcmask 125952
      %2412 = vst.msk [vmem:[%s396] sm:$0xf] %vm2411, %v2409
      %2413 = vrot.lane.b32.xlu0 %v2404, 105
      %v2414 = vpop.permute.xlu0 %2413
      %vm2416 = vcmask 257152
      %2417 = vst.msk [vmem:[%s396] sm:$0xf] %vm2416, %v2414
      %2418 = vrot.lane.b32.xlu0 %v2404, 102
      %v2419 = vpop.permute.xlu0 %2418
      %vm2421 = vcmask 388352
      %2422 = vst.msk [vmem:[%s396] sm:$0xf] %vm2421, %v2419
      %2423 = vrot.lane.b32.xlu0 %v2404, 99
      %v2424 = vpop.permute.xlu0 %2423
      %vm2426 = vcmask 519552
      %2427 = vst.msk [vmem:[%s396] sm:$0xf] %vm2426, %v2424
      %2428 = vrot.lane.b32.xlu0 %v2404, 96
      %v2429 = vpop.permute.xlu0 %2428
      %vm2431 = vcmask 650752
      %2432 = vst.msk [vmem:[%s396] sm:$0xf] %vm2431, %v2429
      %v2434 = vcombine.low %v2404, %v2405
      %2435 = vrot.lane.b32.xlu0 %v2434, 93
      %v2436 = vpop.permute.xlu0 %2435
      %v2437 = vrot.slane %v2436, 4
      %vm2438 = vcmask 760832
      %v2439 = vsel %vm2438, %v2436, %v2437
      %vm2441 = vcmask 781952
      %2442 = vst.msk [vmem:[%s396] sm:$0xf] %vm2441, %v2439
      %2443 = vrot.lane.b32.xlu0 %v2405, 90
      %v2444 = vpop.permute.xlu0 %2443
      %vm2446 = vcmask 913152
      %2447 = vst.msk [vmem:[%s396] sm:$0xf] %vm2446, %v2444
      %2448 = vrot.lane.b32.xlu0 %v2405, 87
      %v2449 = vpop.permute.xlu0 %2448
      %vm2451 = vcmask 1044352
      %2452 = vst.msk [vmem:[%s396] sm:$0xf] %vm2451, %v2449
      %2453 = vrot.lane.b32.xlu0 %v2405, 84
      %v2454 = vpop.permute.xlu0 %2453
      %2456 = vst.msk [vmem:[%s396 + $0x4] sm:$0xf] %vm2411, %v2454
      %2457 = vrot.lane.b32.xlu0 %v2405, 81
      %v2458 = vpop.permute.xlu0 %2457
      %2460 = vst.msk [vmem:[%s396 + $0x4] sm:$0xf] %vm2416, %v2458
      %2461 = vrot.lane.b32.xlu0 %v2405, 78
      %v2462 = vpop.permute.xlu0 %2461
      %2464 = vst.msk [vmem:[%s396 + $0x4] sm:$0xf] %vm2421, %v2462
      %2465 = vrot.lane.b32.xlu0 %v2405, 75
      %v2466 = vpop.permute.xlu0 %2465
      %2468 = vst.msk [vmem:[%s396 + $0x4] sm:$0xf] %vm2426, %v2466
      %v2470 = vcombine.low %v2405, %v2406
      %2471 = vrot.lane.b32.xlu0 %v2470, 72
      %v2472 = vpop.permute.xlu0 %2471
      %v2473 = vrot.slane %v2472, 4
      %vm2474 = vcmask 588800
      %v2475 = vsel %vm2474, %v2472, %v2473
      %2477 = vst.msk [vmem:[%s396 + $0x4] sm:$0xf] %vm2431, %v2475
      %2478 = vrot.lane.b32.xlu0 %v2406, 69
      %v2479 = vpop.permute.xlu0 %2478
      %2481 = vst.msk [vmem:[%s396 + $0x4] sm:$0xf] %vm2441, %v2479
      %2482 = vrot.lane.b32.xlu0 %v2406, 66
      %v2483 = vpop.permute.xlu0 %2482
      %2485 = vst.msk [vmem:[%s396 + $0x4] sm:$0xf] %vm2446, %v2483
      %2486 = vrot.lane.b32.xlu0 %v2406, 63
      %v2487 = vpop.permute.xlu0 %2486
      %2489 = vst.msk [vmem:[%s396 + $0x4] sm:$0xf] %vm2451, %v2487
      %p2490 = scmp.lt.s32.totalorder %s21, 1
      %s2491 = scalar_select %p2490, %s21, 1
      %s2492 = smul.addr %s2491, 2
      %s2493 = smul.addr %s2492, 4
      %s2494 = scalar_lea.vmem %s10, %s2493
      // Predicated region
      $region61: #{upsample_forward.1} parent=59 // pred_check
        %p2495 = pneg %p264
      $region62: #{upsample_forward.1} parent=59 // pred_check_branch
        %2497 = sbr.rel (%p2495) target = $region64
      $region63: #{upsample_forward.1} parent=59 // pred_region
        _
      $region64: #{upsample_forward.1} parent=59 // pred_fallthru
        _
    $region60: #{upsample_forward.1} parent=5 // pred_fallthru
      _
    %p2498 = scmp.le.s32.totalorder 2, %s16
    // Predicated region
    $region65: #{upsample_forward.1} parent=5 // pred_check
      %p2499 = pneg %p2498
    $region66: #{upsample_forward.1} parent=5 // pred_check_branch
      %2501 = sbr.rel (%p2499) target = $region68
    $region67: #{upsample_forward.1} parent=5 // pred_region
      %s2502 = ssub.s32 %s16, 2
      // Predicated region
      $region69: #{upsample_forward.1} parent=67 // pred_check
        %p2503 = pneg %p270
      $region70: #{upsample_forward.1} parent=67 // pred_check_branch
        %2505 = sbr.rel (%p2503) target = $region72
      $region71: #{upsample_forward.1} parent=67 // pred_region
        %p2506 = scmp.lt.s32.totalorder %s22, 1
        %s2507 = scalar_select %p2506, %s22, 1
        %s2508 = smul.addr %s2507, 2
        %s2509 = smul.addr %s2508, 4
        %s2510 = scalar_lea.vmem %s10, %s2509
      $region72: #{upsample_forward.1} parent=67 // pred_fallthru
        _
    $region68: #{upsample_forward.1} parent=5 // pred_fallthru
      _
  $region6: #{upsample_forward.1} parent=0 // loop_footer
    %s20 = sadd.s32 1, %s16
  $region7: #{upsample_forward.1} parent=0 // loop_footer_branch
    %15 = sbr.rel target = $region3
  $region8: #{upsample_forward.1} parent=0 // loop_exit
    _

</llo_original>
